<compile_context>
chip_gen: v7x
topology: tpu7x:2x2x1
jax: 0.10.0
libtpu: 0.0.40
codegen_flags: <defaults>
</compile_context>

<pallas_src>
import functools

import jax
import jax.numpy as jnp
import numpy as np
from jax.experimental import pallas as pl
from jax.experimental.pallas import tpu as pltpu

LANES = 128
STEM_PATCH = 4
DEPTH = 3                       # number of 2x downsample stages after the stem
DIMS = [16, 32, 64, 128]        # channels of layers.0 .. layers.3
RETURN_IDX = [1, 2, 3]          # return_layers = ['layers.1','layers.2','layers.3']
STRIDES = [8, 16, 32]
CHANNELS = [DIMS[i] for i in RETURN_IDX]


# ----------------------------------------------------------------------------
# Pallas kernel: one whole hierarchical stage, fully fused.
#   t = x @ Wp + bp                         (patch-embed / 2x2-merge projection)
#   y = t + relu(t @ W1 + b1) @ W2 + b2     (MLP block with residual)
# Operands are "row packed" (k tokens concatenated along channels) and weights are
# block-diagonal, so all operands are lane-dense and no in-kernel reshapes are needed.
# ----------------------------------------------------------------------------
def _stage_kernel(x_ref, wp_ref, bp_ref, w1_ref, b1_ref, w2_ref, b2_ref, o_ref):
    x = x_ref[...].astype(jnp.bfloat16)
    t = jnp.dot(x, wp_ref[...], preferred_element_type=jnp.float32) + bp_ref[...]
    h = jnp.dot(t.astype(jnp.bfloat16), w1_ref[...],
                preferred_element_type=jnp.float32) + b1_ref[...]
    h = jnp.maximum(h, 0.0)
    y = t + jnp.dot(h.astype(jnp.bfloat16), w2_ref[...],
                    preferred_element_type=jnp.float32) + b2_ref[...]
    o_ref[...] = y.astype(o_ref.dtype)


# ----------------------------------------------------------------------------
# Generation-aware tiling
# ----------------------------------------------------------------------------
@functools.lru_cache(maxsize=1)
def _tpu_vmem_and_cores():
    try:
        vmem = int(pltpu.get_tpu_info().vmem_capacity_bytes)
    except Exception:
        vmem = 128 << 20
    # v7x: 64 MiB per TensorCore, 2 TCs/chip.  v5e/v6e: 128 MiB, single TC.
    cores = 2 if vmem <= (64 << 20) else 1
    return vmem, cores


def _choose_block_rows(rp, row_bytes, vmem_cap, n_cores):
    """Largest packed-row tile that divides rp, is a multiple of 8, fits the
    per-generation VMEM budget, and (on multi-core chips) leaves an even number
    of grid steps so rows split across both TensorCores."""
    if rp <= 8 or rp % 8 != 0:
        return rp                       # tiny / unaligned: single full block
    budget = (12 << 20) if vmem_cap <= (64 << 20) else (20 << 20)
    cap = min(rp, max(8, budget // max(1, row_bytes)))
    if n_cores > 1:
        cap = min(cap, rp // 2)         # need >= 2 steps for megacore split
    cap = max(8, (cap // 8) * 8)

    def _best(pred):
        for bm in range(cap, 7, -8):
            if rp % bm == 0 and pred(rp // bm):
                return bm
        return None

    if n_cores > 1:
        bm = _best(lambda steps: steps % n_cores == 0)
        if bm is not None:
            return bm
    bm = _best(lambda steps: True)
    if bm is not None:
        return bm
    # No aligned divisor <= cap: smallest aligned divisor above it (minimal overshoot).
    for bm in range(cap + 8, rp, 8):
        if rp % bm == 0:
            return bm
    return rp


def fused_stage_pallas(x_packed, wp, bp, w1, b1, w2, b2, out_dtype=jnp.bfloat16):
    """x_packed: (rp, k*Cin); packed block-diagonal weights; returns (rp, k*Cout)."""
    rp, cin_p = x_packed.shape
    cout_p = wp.shape[1]
    hid_p = w1.shape[1]
    x_bytes = jnp.dtype(x_packed.dtype).itemsize
    o_bytes = jnp.dtype(out_dtype).itemsize
    # per packed row: double-buffered x + out tiles, plus f32 t/h intermediates
    row_bytes = 2 * (cin_p * x_bytes + cout_p * o_bytes) + 4 * (cout_p + hid_p)
    vmem_cap, n_cores = _tpu_vmem_and_cores()
    bm = _choose_block_rows(rp, row_bytes, vmem_cap, n_cores)
    weight_bytes = sum(int(np.prod(a.shape)) * jnp.dtype(a.dtype).itemsize
                       for a in (wp, bp, w1, b1, w2, b2))
    need = 2 * weight_bytes + bm * row_bytes
    vmem_limit = int(min(vmem_cap - (4 << 20), max(32 << 20, need + (8 << 20))))
    grid = (rp // bm,)
    return pl.pallas_call(
        _stage_kernel,
        out_shape=jax.ShapeDtypeStruct((rp, cout_p), out_dtype),
        grid_spec=pltpu.PrefetchScalarGridSpec(
            num_scalar_prefetch=0,
            grid=grid,
            in_specs=[
                pl.BlockSpec((bm, cin_p), lambda i: (i, 0)),       # packed activations
                pl.BlockSpec((cin_p, cout_p), lambda i: (0, 0)),   # Wp (resident)
                pl.BlockSpec((1, cout_p), lambda i: (0, 0)),       # bp
                pl.BlockSpec((cout_p, hid_p), lambda i: (0, 0)),   # W1
                pl.BlockSpec((1, hid_p), lambda i: (0, 0)),        # b1
                pl.BlockSpec((hid_p, cout_p), lambda i: (0, 0)),   # W2
                pl.BlockSpec((1, cout_p), lambda i: (0, 0)),       # b2
            ],
            out_specs=pl.BlockSpec((bm, cout_p), lambda i: (i, 0)),
        ),
        compiler_params=pltpu.CompilerParams(
            dimension_semantics=("parallel",),
            vmem_limit_bytes=vmem_limit,
        ),
    )(x_packed, wp, bp, w1, b1, w2, b2)


# ----------------------------------------------------------------------------
# Glue: layout conversions (plain JAX reshapes / single-pass transposes)
# ----------------------------------------------------------------------------
def nchw_patchify_morton(x, p, depth):
    """NCHW (B,C,H,W) -> bf16 tokens (B*(H/p)*(W/p), C*p*p) in hierarchical
    2x2-block (Morton-to-`depth`) order, so every later 2x2 merge is a free reshape.
    Single combined transpose (patch extraction + Morton ordering + bf16 cast)."""
    B, C, H, W = x.shape
    q = 1 << depth
    assert H % (p * q) == 0 and W % (p * q) == 0, \
        "spatial dims must be divisible by stem_patch * 2**depth"
    Ho, Wo = H // p, W // p
    Hb, Wb = Ho // q, Wo // q
    shape = (B, C, Hb) + (2,) * depth + (p, Wb) + (2,) * depth + (p,)
    x = x.reshape(shape)
    # axes: 0=B, 1=C, 2=Hb, 3..2+d=h levels, 3+d=hp, 4+d=Wb, 5+d..4+2d=w levels, 5+2d=wp
    perm = [0, 2, 4 + depth]
    for i in range(depth):
        perm += [3 + i, 5 + depth + i]
    perm += [1, 3 + depth, 5 + 2 * depth]
    x = jnp.transpose(x, tuple(perm))      # (B,Hb,Wb, h1,w1,...,hd,wd, C,p,p)
    tok = x.reshape(B * Ho * Wo, C * p * p).astype(jnp.bfloat16)
    return tok, (B, Hb, Wb)


def tokens_merge2x2(tok, C):
    """Morton-ordered tokens (M, C) -> merged tokens (M/4, 4*C).  Free reshape:
    four consecutive tokens already form a 2x2 spatial window."""
    M = tok.shape[0]
    return tok.reshape(M // 4, 4 * C)


def tokens_to_nchw_f32(tok, B, Hb, Wb, depth, C):
    """Morton-ordered (remaining `depth`) tokens -> NCHW float32 feature map.
    Single transpose: Morton-undo + NHWC->NCHW + bf16->f32 upcast fused."""
    if depth == 0:
        x = tok.reshape(B, Hb, Wb, C)
        return jnp.transpose(x, (0, 3, 1, 2)).astype(jnp.float32)
    shape = (B, Hb, Wb) + (2, 2) * depth + (C,)
    x = tok.reshape(shape)
    # axes: 0=B, 1=Hb, 2=Wb, (3+2i)=h_i, (4+2i)=w_i, 3+2*depth=C
    perm = ([0, 3 + 2 * depth, 1]
            + [3 + 2 * i for i in range(depth)]
            + [2]
            + [4 + 2 * i for i in range(depth)])
    x = jnp.transpose(x, tuple(perm))      # (B, C, Hb, h..., Wb, w...)
    return x.reshape(B, C, Hb << depth, Wb << depth).astype(jnp.float32)


# ----------------------------------------------------------------------------
# Synthetic hierarchical backbone (stem stride 4, three 2x downsample stages).
# Stage outputs 1, 2, 3 are returned -> strides [8, 16, 32], matching the
# TimmModel return_layers = ['layers.1', 'layers.2', 'layers.3'] semantics.
# ----------------------------------------------------------------------------
def _pack_factor(*widths, max_k=8):
    """Smallest power-of-two k <= max_k making every width lane-dense (mult of 128)."""
    k = 1
    while k <= max_k:
        if all((k * w) % LANES == 0 for w in widths):
            return k
        k *= 2
    return 1


def _init_linear(key, k_in, k_out):
    kw, kb = jax.random.split(key)
    w = jax.random.normal(kw, (k_in, k_out), jnp.float32) * (1.0 / np.sqrt(k_in))
    b = 0.01 * jax.random.normal(kb, (1, k_out), jnp.float32)
    return w, b


def init_params(key, in_chans=3):
    """Plain (unpacked, f32) parameters of the synthetic hierarchical backbone."""
    params = {}
    key, k = jax.random.split(key)
    params["proj0"] = _init_linear(k, in_chans * STEM_PATCH * STEM_PATCH, DIMS[0])
    for s in range(1, 4):
        key, k = jax.random.split(key)
        params[f"proj{s}"] = _init_linear(k, 4 * DIMS[s - 1], DIMS[s])
    for s in range(4):
        key, k1 = jax.random.split(key)
        key, k2 = jax.random.split(key)
        params[f"blk{s}_fc1"] = _init_linear(k1, DIMS[s], 2 * DIMS[s])
        params[f"blk{s}_fc2"] = _init_linear(k2, 2 * DIMS[s], DIMS[s])
    return params


def pack_params(params, in_chans=3):
    """Pre-pack parameters for the fused stage kernel:
    block-diagonal expansion kron(I_k, W) + bias tiling + bf16 weight cast."""
    packed = []
    for s in range(4):
        cin = in_chans * STEM_PATCH * STEM_PATCH if s == 0 else 4 * DIMS[s - 1]
        cout = DIMS[s]
        hid = 2 * DIMS[s]
        k = _pack_factor(cin, cout, hid)
        eye = jnp.eye(k, dtype=jnp.float32)
        bd = lambda w: jnp.kron(eye, w).astype(jnp.bfloat16)      # noqa: E731
        tile = lambda b: jnp.tile(b, (1, k)).astype(jnp.float32)  # noqa: E731
        wp, bp = params[f"proj{s}"]
        w1, b1 = params[f"blk{s}_fc1"]
        w2, b2 = params[f"blk{s}_fc2"]
        packed.append(dict(wp=bd(wp), bp=tile(bp),
                           w1=bd(w1), b1=tile(b1),
                           w2=bd(w2), b2=tile(b2)))
    return packed


def timm_model_forward(packed_params, x_nchw):
    """x_nchw: (B, 3, H, W) float32 -> list of 3 NCHW float32 feature maps
    (strides 8/16/32), matching return_layers = ['layers.1','layers.2','layers.3']."""
    tok, (B, Hb, Wb) = nchw_patchify_morton(x_nchw, STEM_PATCH, DEPTH)
    C = None
    outputs = []
    for s in range(4):
        p = packed_params[s]
        if s > 0:
            tok = tokens_merge2x2(tok, C)                # free contiguous reshape
        cout = DIMS[s]
        k = p["wp"].shape[1] // cout                     # static pack factor
        M, cin = tok.shape
        assert M % k == 0, f"token count {M} not divisible by pack factor {k}"
        x_packed = tok.reshape(M // k, k * cin)          # free contiguous reshape
        y_packed = fused_stage_pallas(x_packed, p["wp"], p["bp"],
                                      p["w1"], p["b1"], p["w2"], p["b2"])
        tok = y_packed.reshape(M, cout)                  # bf16, free reshape
        C = cout
        if s in RETURN_IDX:
            outputs.append(tokens_to_nchw_f32(tok, B, Hb, Wb, DEPTH - s, C))
    return outputs


# TODO(synk): the real timm hierarchical backbone also contains windowed attention /
# layernorm and pretrained weights; this synthetic stand-in reproduces the multi-scale
# feature-pyramid semantics (strides/channels/layout) with MLP stages only.
# TODO(synk): the NCHW input patchify and the three NCHW output transposes remain XLA
# ops wrapping the pallas_calls; an NHWC-native consumer could drop them entirely.


if __name__ == "__main__":
    key = jax.random.PRNGKey(0)
    kx, kp = jax.random.split(key)

    # small input: batch=2, 3 channels, 64x64 spatial (stride-32 output is 2x2)
    x = jax.random.normal(kx, (2, 3, 64, 64), jnp.float32)
    params = init_params(kp, in_chans=3)
    packed = pack_params(params, in_chans=3)

    fwd = jax.jit(timm_model_forward)
    outs = fwd(packed, x)
    outs = [jax.block_until_ready(o) for o in outs]

    expected = [(2, 32, 8, 8), (2, 64, 4, 4), (2, 128, 2, 2)]
    assert [tuple(o.shape) for o in outs] == expected, \
        f"got {[o.shape for o in outs]}"
    assert all(o.dtype == jnp.float32 for o in outs)
    assert all(bool(jnp.all(jnp.isfinite(o))) for o in outs)
    print("KERNEL_OK")
</pallas_src>

<mosaic_0001>
module attributes {stable_mosaic.version = 11 : i64} {
  func.func @_stage_kernel(%arg0: i32, %arg1: memref<64x384xbf16, #tpu.memory_space<vmem>>, %arg2: memref<384x128xbf16, #tpu.memory_space<vmem>>, %arg3: memref<1x128xf32, #tpu.memory_space<vmem>>, %arg4: memref<128x256xbf16, #tpu.memory_space<vmem>>, %arg5: memref<1x256xf32, #tpu.memory_space<vmem>>, %arg6: memref<256x128xbf16, #tpu.memory_space<vmem>>, %arg7: memref<1x128xf32, #tpu.memory_space<vmem>>, %arg8: memref<64x128xbf16, #tpu.memory_space<vmem>>) attributes {dimension_semantics = [#tpu.dimension_semantics<parallel>], iteration_bounds = array<i64: 1>, scalar_prefetch = 0 : i64, scratch_operands = 0 : i64, tpu.core_type = #tpu.core_type<tc>, window_params = [{transform_indices = @transform_0, window_bounds = array<i64: 64, 384>}, {pipeline_mode = #tpu.pipeline_mode<synchronous>, transform_indices = @transform_1, window_bounds = array<i64: 384, 128>}, {pipeline_mode = #tpu.pipeline_mode<synchronous>, transform_indices = @transform_2, window_bounds = array<i64: 1, 128>}, {pipeline_mode = #tpu.pipeline_mode<synchronous>, transform_indices = @transform_3, window_bounds = array<i64: 128, 256>}, {pipeline_mode = #tpu.pipeline_mode<synchronous>, transform_indices = @transform_4, window_bounds = array<i64: 1, 256>}, {pipeline_mode = #tpu.pipeline_mode<synchronous>, transform_indices = @transform_5, window_bounds = array<i64: 256, 128>}, {pipeline_mode = #tpu.pipeline_mode<synchronous>, transform_indices = @transform_6, window_bounds = array<i64: 1, 128>}, {transform_indices = @transform_7, window_bounds = array<i64: 64, 128>}]} {
    %c0 = arith.constant 0 : index
    %c0_0 = arith.constant 0 : index
    %0 = vector.load %arg1[%c0, %c0_0] : memref<64x384xbf16, #tpu.memory_space<vmem>>, vector<64x384xbf16>
    %c0_1 = arith.constant 0 : index
    %c0_2 = arith.constant 0 : index
    %1 = vector.load %arg2[%c0_1, %c0_2] : memref<384x128xbf16, #tpu.memory_space<vmem>>, vector<384x128xbf16>
    %cst = arith.constant dense<0.000000e+00> : vector<64x128xf32>
    %2 = tpu.matmul %0, %1, %cst {dimension_numbers = #tpu.dot_dimension_numbers<[1], [0], [0], [1], [0, 0, 1, 1], [], []>} : vector<64x384xbf16>, vector<384x128xbf16>, vector<64x128xf32> -> vector<64x128xf32>
    %c0_3 = arith.constant 0 : index
    %c0_4 = arith.constant 0 : index
    %3 = vector.load %arg3[%c0_3, %c0_4] : memref<1x128xf32, #tpu.memory_space<vmem>>, vector<1x128xf32>
    %4 = vector.broadcast %3 : vector<1x128xf32> to vector<64x128xf32>
    %5 = arith.addf %2, %4 : vector<64x128xf32>
    %6 = arith.truncf %5 : vector<64x128xf32> to vector<64x128xbf16>
    %c0_5 = arith.constant 0 : index
    %c0_6 = arith.constant 0 : index
    %7 = vector.load %arg4[%c0_5, %c0_6] : memref<128x256xbf16, #tpu.memory_space<vmem>>, vector<128x256xbf16>
    %cst_7 = arith.constant dense<0.000000e+00> : vector<64x256xf32>
    %8 = tpu.matmul %6, %7, %cst_7 {dimension_numbers = #tpu.dot_dimension_numbers<[1], [0], [0], [1], [0, 0, 1, 1], [], []>} : vector<64x128xbf16>, vector<128x256xbf16>, vector<64x256xf32> -> vector<64x256xf32>
    %c0_8 = arith.constant 0 : index
    %c0_9 = arith.constant 0 : index
    %9 = vector.load %arg5[%c0_8, %c0_9] : memref<1x256xf32, #tpu.memory_space<vmem>>, vector<1x256xf32>
    %10 = vector.broadcast %9 : vector<1x256xf32> to vector<64x256xf32>
    %11 = arith.addf %8, %10 : vector<64x256xf32>
    %cst_10 = arith.constant 0.000000e+00 : f32
    %12 = vector.broadcast %cst_10 : f32 to vector<64x256xf32>
    %13 = arith.maximumf %11, %12 : vector<64x256xf32>
    %14 = arith.truncf %13 : vector<64x256xf32> to vector<64x256xbf16>
    %c0_11 = arith.constant 0 : index
    %c0_12 = arith.constant 0 : index
    %15 = vector.load %arg6[%c0_11, %c0_12] : memref<256x128xbf16, #tpu.memory_space<vmem>>, vector<256x128xbf16>
    %cst_13 = arith.constant dense<0.000000e+00> : vector<64x128xf32>
    %16 = tpu.matmul %14, %15, %cst_13 {dimension_numbers = #tpu.dot_dimension_numbers<[1], [0], [0], [1], [0, 0, 1, 1], [], []>} : vector<64x256xbf16>, vector<256x128xbf16>, vector<64x128xf32> -> vector<64x128xf32>
    %17 = arith.addf %5, %16 : vector<64x128xf32>
    %c0_14 = arith.constant 0 : index
    %c0_15 = arith.constant 0 : index
    %18 = vector.load %arg7[%c0_14, %c0_15] : memref<1x128xf32, #tpu.memory_space<vmem>>, vector<1x128xf32>
    %19 = vector.broadcast %18 : vector<1x128xf32> to vector<64x128xf32>
    %20 = arith.addf %17, %19 : vector<64x128xf32>
    %21 = arith.truncf %20 : vector<64x128xf32> to vector<64x128xbf16>
    %c0_16 = arith.constant 0 : index
    %c0_17 = arith.constant 0 : index
    %22 = vector.load %arg8[%c0_16, %c0_17] : memref<64x128xbf16, #tpu.memory_space<vmem>>, vector<64x128xbf16>
    tpu.vector_store %arg8[%c0_16, %c0_17], %21 {strides = array<i32>} : memref<64x128xbf16, #tpu.memory_space<vmem>>, vector<64x128xbf16>,
    return
  }
  func.func @transform_0(%arg0: i32) -> (i32, i32) {
    %c0_i32 = arith.constant 0 : i32
    %c0_i32_0 = arith.constant 0 : i32
    return %arg0, %c0_i32 : i32, i32
  }
  func.func @transform_1(%arg0: i32) -> (i32, i32) {
    %c0_i32 = arith.constant 0 : i32
    %c0_i32_0 = arith.constant 0 : i32
    %c0_i32_1 = arith.constant 0 : i32
    return %c0_i32, %c0_i32_0 : i32, i32
  }
  func.func @transform_2(%arg0: i32) -> (i32, i32) {
    %c0_i32 = arith.constant 0 : i32
    %c0_i32_0 = arith.constant 0 : i32
    %c0_i32_1 = arith.constant 0 : i32
    return %c0_i32, %c0_i32_0 : i32, i32
  }
  func.func @transform_3(%arg0: i32) -> (i32, i32) {
    %c0_i32 = arith.constant 0 : i32
    %c0_i32_0 = arith.constant 0 : i32
    %c0_i32_1 = arith.constant 0 : i32
    return %c0_i32, %c0_i32_0 : i32, i32
  }
  func.func @transform_4(%arg0: i32) -> (i32, i32) {
    %c0_i32 = arith.constant 0 : i32
    %c0_i32_0 = arith.constant 0 : i32
    %c0_i32_1 = arith.constant 0 : i32
    return %c0_i32, %c0_i32_0 : i32, i32
  }
  func.func @transform_5(%arg0: i32) -> (i32, i32) {
    %c0_i32 = arith.constant 0 : i32
    %c0_i32_0 = arith.constant 0 : i32
    %c0_i32_1 = arith.constant 0 : i32
    return %c0_i32, %c0_i32_0 : i32, i32
  }
  func.func @transform_6(%arg0: i32) -> (i32, i32) {
    %c0_i32 = arith.constant 0 : i32
    %c0_i32_0 = arith.constant 0 : i32
    %c0_i32_1 = arith.constant 0 : i32
    return %c0_i32, %c0_i32_0 : i32, i32
  }
  func.func @transform_7(%arg0: i32) -> (i32, i32) {
    %c0_i32 = arith.constant 0 : i32
    %c0_i32_0 = arith.constant 0 : i32
    return %arg0, %c0_i32 : i32, i32
  }
}

module attributes {stable_mosaic.version = 11 : i64} {
  func.func @_stage_kernel(%arg0: i32, %arg1: memref<32x256xbf16, #tpu.memory_space<vmem>>, %arg2: memref<256x128xbf16, #tpu.memory_space<vmem>>, %arg3: memref<1x128xf32, #tpu.memory_space<vmem>>, %arg4: memref<128x256xbf16, #tpu.memory_space<vmem>>, %arg5: memref<1x256xf32, #tpu.memory_space<vmem>>, %arg6: memref<256x128xbf16, #tpu.memory_space<vmem>>, %arg7: memref<1x128xf32, #tpu.memory_space<vmem>>, %arg8: memref<32x128xbf16, #tpu.memory_space<vmem>>) attributes {dimension_semantics = [#tpu.dimension_semantics<parallel>], iteration_bounds = array<i64: 1>, scalar_prefetch = 0 : i64, scratch_operands = 0 : i64, tpu.core_type = #tpu.core_type<tc>, window_params = [{transform_indices = @transform_0, window_bounds = array<i64: 32, 256>}, {pipeline_mode = #tpu.pipeline_mode<synchronous>, transform_indices = @transform_1, window_bounds = array<i64: 256, 128>}, {pipeline_mode = #tpu.pipeline_mode<synchronous>, transform_indices = @transform_2, window_bounds = array<i64: 1, 128>}, {pipeline_mode = #tpu.pipeline_mode<synchronous>, transform_indices = @transform_3, window_bounds = array<i64: 128, 256>}, {pipeline_mode = #tpu.pipeline_mode<synchronous>, transform_indices = @transform_4, window_bounds = array<i64: 1, 256>}, {pipeline_mode = #tpu.pipeline_mode<synchronous>, transform_indices = @transform_5, window_bounds = array<i64: 256, 128>}, {pipeline_mode = #tpu.pipeline_mode<synchronous>, transform_indices = @transform_6, window_bounds = array<i64: 1, 128>}, {transform_indices = @transform_7, window_bounds = array<i64: 32, 128>}]} {
    %c0 = arith.constant 0 : index
    %c0_0 = arith.constant 0 : index
    %0 = vector.load %arg1[%c0, %c0_0] : memref<32x256xbf16, #tpu.memory_space<vmem>>, vector<32x256xbf16>
    %c0_1 = arith.constant 0 : index
    %c0_2 = arith.constant 0 : index
    %1 = vector.load %arg2[%c0_1, %c0_2] : memref<256x128xbf16, #tpu.memory_space<vmem>>, vector<256x128xbf16>
    %cst = arith.constant dense<0.000000e+00> : vector<32x128xf32>
    %2 = tpu.matmul %0, %1, %cst {dimension_numbers = #tpu.dot_dimension_numbers<[1], [0], [0], [1], [0, 0, 1, 1], [], []>} : vector<32x256xbf16>, vector<256x128xbf16>, vector<32x128xf32> -> vector<32x128xf32>
    %c0_3 = arith.constant 0 : index
    %c0_4 = arith.constant 0 : index
    %3 = vector.load %arg3[%c0_3, %c0_4] : memref<1x128xf32, #tpu.memory_space<vmem>>, vector<1x128xf32>
    %4 = vector.broadcast %3 : vector<1x128xf32> to vector<32x128xf32>
    %5 = arith.addf %2, %4 : vector<32x128xf32>
    %6 = arith.truncf %5 : vector<32x128xf32> to vector<32x128xbf16>
    %c0_5 = arith.constant 0 : index
    %c0_6 = arith.constant 0 : index
    %7 = vector.load %arg4[%c0_5, %c0_6] : memref<128x256xbf16, #tpu.memory_space<vmem>>, vector<128x256xbf16>
    %cst_7 = arith.constant dense<0.000000e+00> : vector<32x256xf32>
    %8 = tpu.matmul %6, %7, %cst_7 {dimension_numbers = #tpu.dot_dimension_numbers<[1], [0], [0], [1], [0, 0, 1, 1], [], []>} : vector<32x128xbf16>, vector<128x256xbf16>, vector<32x256xf32> -> vector<32x256xf32>
    %c0_8 = arith.constant 0 : index
    %c0_9 = arith.constant 0 : index
    %9 = vector.load %arg5[%c0_8, %c0_9] : memref<1x256xf32, #tpu.memory_space<vmem>>, vector<1x256xf32>
    %10 = vector.broadcast %9 : vector<1x256xf32> to vector<32x256xf32>
    %11 = arith.addf %8, %10 : vector<32x256xf32>
    %cst_10 = arith.constant 0.000000e+00 : f32
    %12 = vector.broadcast %cst_10 : f32 to vector<32x256xf32>
    %13 = arith.maximumf %11, %12 : vector<32x256xf32>
    %14 = arith.truncf %13 : vector<32x256xf32> to vector<32x256xbf16>
    %c0_11 = arith.constant 0 : index
    %c0_12 = arith.constant 0 : index
    %15 = vector.load %arg6[%c0_11, %c0_12] : memref<256x128xbf16, #tpu.memory_space<vmem>>, vector<256x128xbf16>
    %cst_13 = arith.constant dense<0.000000e+00> : vector<32x128xf32>
    %16 = tpu.matmul %14, %15, %cst_13 {dimension_numbers = #tpu.dot_dimension_numbers<[1], [0], [0], [1], [0, 0, 1, 1], [], []>} : vector<32x256xbf16>, vector<256x128xbf16>, vector<32x128xf32> -> vector<32x128xf32>
    %17 = arith.addf %5, %16 : vector<32x128xf32>
    %c0_14 = arith.constant 0 : index
    %c0_15 = arith.constant 0 : index
    %18 = vector.load %arg7[%c0_14, %c0_15] : memref<1x128xf32, #tpu.memory_space<vmem>>, vector<1x128xf32>
    %19 = vector.broadcast %18 : vector<1x128xf32> to vector<32x128xf32>
    %20 = arith.addf %17, %19 : vector<32x128xf32>
    %21 = arith.truncf %20 : vector<32x128xf32> to vector<32x128xbf16>
    %c0_16 = arith.constant 0 : index
    %c0_17 = arith.constant 0 : index
    %22 = vector.load %arg8[%c0_16, %c0_17] : memref<32x128xbf16, #tpu.memory_space<vmem>>, vector<32x128xbf16>
    tpu.vector_store %arg8[%c0_16, %c0_17], %21 {strides = array<i32>} : memref<32x128xbf16, #tpu.memory_space<vmem>>, vector<32x128xbf16>,
    return
  }
  func.func @transform_0(%arg0: i32) -> (i32, i32) {
    %c0_i32 = arith.constant 0 : i32
    %c0_i32_0 = arith.constant 0 : i32
    return %arg0, %c0_i32 : i32, i32
  }
  func.func @transform_1(%arg0: i32) -> (i32, i32) {
    %c0_i32 = arith.constant 0 : i32
    %c0_i32_0 = arith.constant 0 : i32
    %c0_i32_1 = arith.constant 0 : i32
    return %c0_i32, %c0_i32_0 : i32, i32
  }
  func.func @transform_2(%arg0: i32) -> (i32, i32) {
    %c0_i32 = arith.constant 0 : i32
    %c0_i32_0 = arith.constant 0 : i32
    %c0_i32_1 = arith.constant 0 : i32
    return %c0_i32, %c0_i32_0 : i32, i32
  }
  func.func @transform_3(%arg0: i32) -> (i32, i32) {
    %c0_i32 = arith.constant 0 : i32
    %c0_i32_0 = arith.constant 0 : i32
    %c0_i32_1 = arith.constant 0 : i32
    return %c0_i32, %c0_i32_0 : i32, i32
  }
  func.func @transform_4(%arg0: i32) -> (i32, i32) {
    %c0_i32 = arith.constant 0 : i32
    %c0_i32_0 = arith.constant 0 : i32
    %c0_i32_1 = arith.constant 0 : i32
    return %c0_i32, %c0_i32_0 : i32, i32
  }
  func.func @transform_5(%arg0: i32) -> (i32, i32) {
    %c0_i32 = arith.constant 0 : i32
    %c0_i32_0 = arith.constant 0 : i32
    %c0_i32_1 = arith.constant 0 : i32
    return %c0_i32, %c0_i32_0 : i32, i32
  }
  func.func @transform_6(%arg0: i32) -> (i32, i32) {
    %c0_i32 = arith.constant 0 : i32
    %c0_i32_0 = arith.constant 0 : i32
    %c0_i32_1 = arith.constant 0 : i32
    return %c0_i32, %c0_i32_0 : i32, i32
  }
  func.func @transform_7(%arg0: i32) -> (i32, i32) {
    %c0_i32 = arith.constant 0 : i32
    %c0_i32_0 = arith.constant 0 : i32
    return %arg0, %c0_i32 : i32, i32
  }
}

module attributes {stable_mosaic.version = 11 : i64} {
  func.func @_stage_kernel(%arg0: i32, %arg1: memref<16x256xbf16, #tpu.memory_space<vmem>>, %arg2: memref<256x128xbf16, #tpu.memory_space<vmem>>, %arg3: memref<1x128xf32, #tpu.memory_space<vmem>>, %arg4: memref<128x256xbf16, #tpu.memory_space<vmem>>, %arg5: memref<1x256xf32, #tpu.memory_space<vmem>>, %arg6: memref<256x128xbf16, #tpu.memory_space<vmem>>, %arg7: memref<1x128xf32, #tpu.memory_space<vmem>>, %arg8: memref<16x128xbf16, #tpu.memory_space<vmem>>) attributes {dimension_semantics = [#tpu.dimension_semantics<parallel>], iteration_bounds = array<i64: 1>, scalar_prefetch = 0 : i64, scratch_operands = 0 : i64, tpu.core_type = #tpu.core_type<tc>, window_params = [{transform_indices = @transform_0, window_bounds = array<i64: 16, 256>}, {pipeline_mode = #tpu.pipeline_mode<synchronous>, transform_indices = @transform_1, window_bounds = array<i64: 256, 128>}, {pipeline_mode = #tpu.pipeline_mode<synchronous>, transform_indices = @transform_2, window_bounds = array<i64: 1, 128>}, {pipeline_mode = #tpu.pipeline_mode<synchronous>, transform_indices = @transform_3, window_bounds = array<i64: 128, 256>}, {pipeline_mode = #tpu.pipeline_mode<synchronous>, transform_indices = @transform_4, window_bounds = array<i64: 1, 256>}, {pipeline_mode = #tpu.pipeline_mode<synchronous>, transform_indices = @transform_5, window_bounds = array<i64: 256, 128>}, {pipeline_mode = #tpu.pipeline_mode<synchronous>, transform_indices = @transform_6, window_bounds = array<i64: 1, 128>}, {transform_indices = @transform_7, window_bounds = array<i64: 16, 128>}]} {
    %c0 = arith.constant 0 : index
    %c0_0 = arith.constant 0 : index
    %0 = vector.load %arg1[%c0, %c0_0] : memref<16x256xbf16, #tpu.memory_space<vmem>>, vector<16x256xbf16>
    %c0_1 = arith.constant 0 : index
    %c0_2 = arith.constant 0 : index
    %1 = vector.load %arg2[%c0_1, %c0_2] : memref<256x128xbf16, #tpu.memory_space<vmem>>, vector<256x128xbf16>
    %cst = arith.constant dense<0.000000e+00> : vector<16x128xf32>
    %2 = tpu.matmul %0, %1, %cst {dimension_numbers = #tpu.dot_dimension_numbers<[1], [0], [0], [1], [0, 0, 1, 1], [], []>} : vector<16x256xbf16>, vector<256x128xbf16>, vector<16x128xf32> -> vector<16x128xf32>
    %c0_3 = arith.constant 0 : index
    %c0_4 = arith.constant 0 : index
    %3 = vector.load %arg3[%c0_3, %c0_4] : memref<1x128xf32, #tpu.memory_space<vmem>>, vector<1x128xf32>
    %4 = vector.broadcast %3 : vector<1x128xf32> to vector<16x128xf32>
    %5 = arith.addf %2, %4 : vector<16x128xf32>
    %6 = arith.truncf %5 : vector<16x128xf32> to vector<16x128xbf16>
    %c0_5 = arith.constant 0 : index
    %c0_6 = arith.constant 0 : index
    %7 = vector.load %arg4[%c0_5, %c0_6] : memref<128x256xbf16, #tpu.memory_space<vmem>>, vector<128x256xbf16>
    %cst_7 = arith.constant dense<0.000000e+00> : vector<16x256xf32>
    %8 = tpu.matmul %6, %7, %cst_7 {dimension_numbers = #tpu.dot_dimension_numbers<[1], [0], [0], [1], [0, 0, 1, 1], [], []>} : vector<16x128xbf16>, vector<128x256xbf16>, vector<16x256xf32> -> vector<16x256xf32>
    %c0_8 = arith.constant 0 : index
    %c0_9 = arith.constant 0 : index
    %9 = vector.load %arg5[%c0_8, %c0_9] : memref<1x256xf32, #tpu.memory_space<vmem>>, vector<1x256xf32>
    %10 = vector.broadcast %9 : vector<1x256xf32> to vector<16x256xf32>
    %11 = arith.addf %8, %10 : vector<16x256xf32>
    %cst_10 = arith.constant 0.000000e+00 : f32
    %12 = vector.broadcast %cst_10 : f32 to vector<16x256xf32>
    %13 = arith.maximumf %11, %12 : vector<16x256xf32>
    %14 = arith.truncf %13 : vector<16x256xf32> to vector<16x256xbf16>
    %c0_11 = arith.constant 0 : index
    %c0_12 = arith.constant 0 : index
    %15 = vector.load %arg6[%c0_11, %c0_12] : memref<256x128xbf16, #tpu.memory_space<vmem>>, vector<256x128xbf16>
    %cst_13 = arith.constant dense<0.000000e+00> : vector<16x128xf32>
    %16 = tpu.matmul %14, %15, %cst_13 {dimension_numbers = #tpu.dot_dimension_numbers<[1], [0], [0], [1], [0, 0, 1, 1], [], []>} : vector<16x256xbf16>, vector<256x128xbf16>, vector<16x128xf32> -> vector<16x128xf32>
    %17 = arith.addf %5, %16 : vector<16x128xf32>
    %c0_14 = arith.constant 0 : index
    %c0_15 = arith.constant 0 : index
    %18 = vector.load %arg7[%c0_14, %c0_15] : memref<1x128xf32, #tpu.memory_space<vmem>>, vector<1x128xf32>
    %19 = vector.broadcast %18 : vector<1x128xf32> to vector<16x128xf32>
    %20 = arith.addf %17, %19 : vector<16x128xf32>
    %21 = arith.truncf %20 : vector<16x128xf32> to vector<16x128xbf16>
    %c0_16 = arith.constant 0 : index
    %c0_17 = arith.constant 0 : index
    %22 = vector.load %arg8[%c0_16, %c0_17] : memref<16x128xbf16, #tpu.memory_space<vmem>>, vector<16x128xbf16>
    tpu.vector_store %arg8[%c0_16, %c0_17], %21 {strides = array<i32>} : memref<16x128xbf16, #tpu.memory_space<vmem>>, vector<16x128xbf16>,
    return
  }
  func.func @transform_0(%arg0: i32) -> (i32, i32) {
    %c0_i32 = arith.constant 0 : i32
    %c0_i32_0 = arith.constant 0 : i32
    return %arg0, %c0_i32 : i32, i32
  }
  func.func @transform_1(%arg0: i32) -> (i32, i32) {
    %c0_i32 = arith.constant 0 : i32
    %c0_i32_0 = arith.constant 0 : i32
    %c0_i32_1 = arith.constant 0 : i32
    return %c0_i32, %c0_i32_0 : i32, i32
  }
  func.func @transform_2(%arg0: i32) -> (i32, i32) {
    %c0_i32 = arith.constant 0 : i32
    %c0_i32_0 = arith.constant 0 : i32
    %c0_i32_1 = arith.constant 0 : i32
    return %c0_i32, %c0_i32_0 : i32, i32
  }
  func.func @transform_3(%arg0: i32) -> (i32, i32) {
    %c0_i32 = arith.constant 0 : i32
    %c0_i32_0 = arith.constant 0 : i32
    %c0_i32_1 = arith.constant 0 : i32
    return %c0_i32, %c0_i32_0 : i32, i32
  }
  func.func @transform_4(%arg0: i32) -> (i32, i32) {
    %c0_i32 = arith.constant 0 : i32
    %c0_i32_0 = arith.constant 0 : i32
    %c0_i32_1 = arith.constant 0 : i32
    return %c0_i32, %c0_i32_0 : i32, i32
  }
  func.func @transform_5(%arg0: i32) -> (i32, i32) {
    %c0_i32 = arith.constant 0 : i32
    %c0_i32_0 = arith.constant 0 : i32
    %c0_i32_1 = arith.constant 0 : i32
    return %c0_i32, %c0_i32_0 : i32, i32
  }
  func.func @transform_6(%arg0: i32) -> (i32, i32) {
    %c0_i32 = arith.constant 0 : i32
    %c0_i32_0 = arith.constant 0 : i32
    %c0_i32_1 = arith.constant 0 : i32
    return %c0_i32, %c0_i32_0 : i32, i32
  }
  func.func @transform_7(%arg0: i32) -> (i32, i32) {
    %c0_i32 = arith.constant 0 : i32
    %c0_i32_0 = arith.constant 0 : i32
    return %arg0, %c0_i32 : i32, i32
  }
}

module attributes {stable_mosaic.version = 11 : i64} {
  func.func @_stage_kernel(%arg0: i32, %arg1: memref<8x256xbf16, #tpu.memory_space<vmem>>, %arg2: memref<256x128xbf16, #tpu.memory_space<vmem>>, %arg3: memref<1x128xf32, #tpu.memory_space<vmem>>, %arg4: memref<128x256xbf16, #tpu.memory_space<vmem>>, %arg5: memref<1x256xf32, #tpu.memory_space<vmem>>, %arg6: memref<256x128xbf16, #tpu.memory_space<vmem>>, %arg7: memref<1x128xf32, #tpu.memory_space<vmem>>, %arg8: memref<8x128xbf16, #tpu.memory_space<vmem>>) attributes {dimension_semantics = [#tpu.dimension_semantics<parallel>], iteration_bounds = array<i64: 1>, scalar_prefetch = 0 : i64, scratch_operands = 0 : i64, tpu.core_type = #tpu.core_type<tc>, window_params = [{transform_indices = @transform_0, window_bounds = array<i64: 8, 256>}, {pipeline_mode = #tpu.pipeline_mode<synchronous>, transform_indices = @transform_1, window_bounds = array<i64: 256, 128>}, {pipeline_mode = #tpu.pipeline_mode<synchronous>, transform_indices = @transform_2, window_bounds = array<i64: 1, 128>}, {pipeline_mode = #tpu.pipeline_mode<synchronous>, transform_indices = @transform_3, window_bounds = array<i64: 128, 256>}, {pipeline_mode = #tpu.pipeline_mode<synchronous>, transform_indices = @transform_4, window_bounds = array<i64: 1, 256>}, {pipeline_mode = #tpu.pipeline_mode<synchronous>, transform_indices = @transform_5, window_bounds = array<i64: 256, 128>}, {pipeline_mode = #tpu.pipeline_mode<synchronous>, transform_indices = @transform_6, window_bounds = array<i64: 1, 128>}, {transform_indices = @transform_7, window_bounds = array<i64: 8, 128>}]} {
    %c0 = arith.constant 0 : index
    %c0_0 = arith.constant 0 : index
    %0 = vector.load %arg1[%c0, %c0_0] : memref<8x256xbf16, #tpu.memory_space<vmem>>, vector<8x256xbf16>
    %c0_1 = arith.constant 0 : index
    %c0_2 = arith.constant 0 : index
    %1 = vector.load %arg2[%c0_1, %c0_2] : memref<256x128xbf16, #tpu.memory_space<vmem>>, vector<256x128xbf16>
    %cst = arith.constant dense<0.000000e+00> : vector<8x128xf32>
    %2 = tpu.matmul %0, %1, %cst {dimension_numbers = #tpu.dot_dimension_numbers<[1], [0], [0], [1], [0, 0, 1, 1], [], []>} : vector<8x256xbf16>, vector<256x128xbf16>, vector<8x128xf32> -> vector<8x128xf32>
    %c0_3 = arith.constant 0 : index
    %c0_4 = arith.constant 0 : index
    %3 = vector.load %arg3[%c0_3, %c0_4] : memref<1x128xf32, #tpu.memory_space<vmem>>, vector<1x128xf32>
    %4 = vector.broadcast %3 : vector<1x128xf32> to vector<8x128xf32>
    %5 = arith.addf %2, %4 : vector<8x128xf32>
    %6 = arith.truncf %5 : vector<8x128xf32> to vector<8x128xbf16>
    %c0_5 = arith.constant 0 : index
    %c0_6 = arith.constant 0 : index
    %7 = vector.load %arg4[%c0_5, %c0_6] : memref<128x256xbf16, #tpu.memory_space<vmem>>, vector<128x256xbf16>
    %cst_7 = arith.constant dense<0.000000e+00> : vector<8x256xf32>
    %8 = tpu.matmul %6, %7, %cst_7 {dimension_numbers = #tpu.dot_dimension_numbers<[1], [0], [0], [1], [0, 0, 1, 1], [], []>} : vector<8x128xbf16>, vector<128x256xbf16>, vector<8x256xf32> -> vector<8x256xf32>
    %c0_8 = arith.constant 0 : index
    %c0_9 = arith.constant 0 : index
    %9 = vector.load %arg5[%c0_8, %c0_9] : memref<1x256xf32, #tpu.memory_space<vmem>>, vector<1x256xf32>
    %10 = vector.broadcast %9 : vector<1x256xf32> to vector<8x256xf32>
    %11 = arith.addf %8, %10 : vector<8x256xf32>
    %cst_10 = arith.constant 0.000000e+00 : f32
    %12 = vector.broadcast %cst_10 : f32 to vector<8x256xf32>
    %13 = arith.maximumf %11, %12 : vector<8x256xf32>
    %14 = arith.truncf %13 : vector<8x256xf32> to vector<8x256xbf16>
    %c0_11 = arith.constant 0 : index
    %c0_12 = arith.constant 0 : index
    %15 = vector.load %arg6[%c0_11, %c0_12] : memref<256x128xbf16, #tpu.memory_space<vmem>>, vector<256x128xbf16>
    %cst_13 = arith.constant dense<0.000000e+00> : vector<8x128xf32>
    %16 = tpu.matmul %14, %15, %cst_13 {dimension_numbers = #tpu.dot_dimension_numbers<[1], [0], [0], [1], [0, 0, 1, 1], [], []>} : vector<8x256xbf16>, vector<256x128xbf16>, vector<8x128xf32> -> vector<8x128xf32>
    %17 = arith.addf %5, %16 : vector<8x128xf32>
    %c0_14 = arith.constant 0 : index
    %c0_15 = arith.constant 0 : index
    %18 = vector.load %arg7[%c0_14, %c0_15] : memref<1x128xf32, #tpu.memory_space<vmem>>, vector<1x128xf32>
    %19 = vector.broadcast %18 : vector<1x128xf32> to vector<8x128xf32>
    %20 = arith.addf %17, %19 : vector<8x128xf32>
    %21 = arith.truncf %20 : vector<8x128xf32> to vector<8x128xbf16>
    %c0_16 = arith.constant 0 : index
    %c0_17 = arith.constant 0 : index
    %22 = vector.load %arg8[%c0_16, %c0_17] : memref<8x128xbf16, #tpu.memory_space<vmem>>, vector<8x128xbf16>
    tpu.vector_store %arg8[%c0_16, %c0_17], %21 {strides = array<i32>} : memref<8x128xbf16, #tpu.memory_space<vmem>>, vector<8x128xbf16>,
    return
  }
  func.func @transform_0(%arg0: i32) -> (i32, i32) {
    %c0_i32 = arith.constant 0 : i32
    %c0_i32_0 = arith.constant 0 : i32
    return %arg0, %c0_i32 : i32, i32
  }
  func.func @transform_1(%arg0: i32) -> (i32, i32) {
    %c0_i32 = arith.constant 0 : i32
    %c0_i32_0 = arith.constant 0 : i32
    %c0_i32_1 = arith.constant 0 : i32
    return %c0_i32, %c0_i32_0 : i32, i32
  }
  func.func @transform_2(%arg0: i32) -> (i32, i32) {
    %c0_i32 = arith.constant 0 : i32
    %c0_i32_0 = arith.constant 0 : i32
    %c0_i32_1 = arith.constant 0 : i32
    return %c0_i32, %c0_i32_0 : i32, i32
  }
  func.func @transform_3(%arg0: i32) -> (i32, i32) {
    %c0_i32 = arith.constant 0 : i32
    %c0_i32_0 = arith.constant 0 : i32
    %c0_i32_1 = arith.constant 0 : i32
    return %c0_i32, %c0_i32_0 : i32, i32
  }
  func.func @transform_4(%arg0: i32) -> (i32, i32) {
    %c0_i32 = arith.constant 0 : i32
    %c0_i32_0 = arith.constant 0 : i32
    %c0_i32_1 = arith.constant 0 : i32
    return %c0_i32, %c0_i32_0 : i32, i32
  }
  func.func @transform_5(%arg0: i32) -> (i32, i32) {
    %c0_i32 = arith.constant 0 : i32
    %c0_i32_0 = arith.constant 0 : i32
    %c0_i32_1 = arith.constant 0 : i32
    return %c0_i32, %c0_i32_0 : i32, i32
  }
  func.func @transform_6(%arg0: i32) -> (i32, i32) {
    %c0_i32 = arith.constant 0 : i32
    %c0_i32_0 = arith.constant 0 : i32
    %c0_i32_1 = arith.constant 0 : i32
    return %c0_i32, %c0_i32_0 : i32, i32
  }
  func.func @transform_7(%arg0: i32) -> (i32, i32) {
    %c0_i32 = arith.constant 0 : i32
    %c0_i32_0 = arith.constant 0 : i32
    return %arg0, %c0_i32 : i32, i32
  }
}

</mosaic_0001>

<llo_original>
// kernel: timm_model_forward.4
$region0: #{timm_model_forward.4}
  #allocation0 [shape = 'u32[]', space=smem, size = 0x4, offset = 0x4, fixed_abs, tag = 'smem constant byte address 0x4 - core index']
  #allocation1 [shape = 'u32[144,128]{1,0:T(1,128)}', space=vmem, size = 0x12000, scoped, tag = 'internal scratch']
  %s0 = inlined_call_operand.vmem [shape: bf16[64,384], index: 0, kind: input, shape index: {}]
  %s1 = inlined_call_operand.vmem [shape: bf16[384,128], index: 1, kind: input, shape index: {}]
  %s2 = inlined_call_operand.vmem [shape: f32[1,128], index: 2, kind: input, shape index: {}]
  %s3 = inlined_call_operand.vmem [shape: bf16[128,256], index: 3, kind: input, shape index: {}]
  %s4 = inlined_call_operand.vmem [shape: f32[1,256], index: 4, kind: input, shape index: {}]
  %s5 = inlined_call_operand.vmem [shape: bf16[256,128], index: 5, kind: input, shape index: {}]
  %s6 = inlined_call_operand.vmem [shape: f32[1,128], index: 6, kind: input, shape index: {}]
  %s7 = inlined_call_operand.vmem [shape: bf16[64,128], index: 7, kind: output, shape index: {}]
  %s8 = sld [smem:[#allocation0]]
  $region38: #{timm_model_forward.4} parent=0
    _
  %s10 = ssub.s32 1, %s8
  %s11 = scalar_select 0, %s10, %s8
  // Predicated region
  $region2: #{timm_model_forward.4} parent=0 // pred_check
    _
  $region3: #{timm_model_forward.4} parent=0 // pred_check_branch
    %13 = sbr.rel (0) target = $region5
  $region4: #{timm_model_forward.4} parent=0 // pred_region
    _
  $region5: #{timm_model_forward.4} parent=0 // pred_fallthru
    _
  // Predicated region
  $region6: #{timm_model_forward.4} parent=0 // pred_check
    _
  $region7: #{timm_model_forward.4} parent=0 // pred_check_branch
    %15 = sbr.rel (0) target = $region9
  $region8: #{timm_model_forward.4} parent=0 // pred_region
    _
  $region9: #{timm_model_forward.4} parent=0 // pred_fallthru
    _
  // Predicated region
  $region10: #{timm_model_forward.4} parent=0 // pred_check
    _
  $region11: #{timm_model_forward.4} parent=0 // pred_check_branch
    %17 = sbr.rel (0) target = $region13
  $region12: #{timm_model_forward.4} parent=0 // pred_region
    _
  $region13: #{timm_model_forward.4} parent=0 // pred_fallthru
    _
  // Predicated region
  $region14: #{timm_model_forward.4} parent=0 // pred_check
    _
  $region15: #{timm_model_forward.4} parent=0 // pred_check_branch
    %19 = sbr.rel (0) target = $region17
  $region16: #{timm_model_forward.4} parent=0 // pred_region
    _
  $region17: #{timm_model_forward.4} parent=0 // pred_fallthru
    _
  // Predicated region
  $region18: #{timm_model_forward.4} parent=0 // pred_check
    _
  $region19: #{timm_model_forward.4} parent=0 // pred_check_branch
    %21 = sbr.rel (0) target = $region21
  $region20: #{timm_model_forward.4} parent=0 // pred_region
    _
  $region21: #{timm_model_forward.4} parent=0 // pred_fallthru
    _
  // Predicated region
  $region22: #{timm_model_forward.4} parent=0 // pred_check
    _
  $region23: #{timm_model_forward.4} parent=0 // pred_check_branch
    %23 = sbr.rel (0) target = $region25
  $region24: #{timm_model_forward.4} parent=0 // pred_region
    _
  $region25: #{timm_model_forward.4} parent=0 // pred_fallthru
    _
  // Predicated region
  $region26: #{timm_model_forward.4} parent=0 // pred_check
    _
  $region27: #{timm_model_forward.4} parent=0 // pred_check_branch
    %25 = sbr.rel (0) target = $region29
  $region28: #{timm_model_forward.4} parent=0 // pred_region
    _
  $region29: #{timm_model_forward.4} parent=0 // pred_fallthru
    _
  %v27 = vld [vmem:[%s0] sm:$0xff]
  %v28 = vld [vmem:[%s0 + $0x8] sm:$0xf]
  %v29 = vld [vmem:[%s0 + $0xc] sm:$0xff]
  %v30 = vld [vmem:[%s0 + $0x14] sm:$0xf]
  %v31 = vld [vmem:[%s0 + $0x18] sm:$0xff]
  %v32 = vld [vmem:[%s0 + $0x20] sm:$0xf]
  %v33 = vld [vmem:[%s0 + $0x24] sm:$0xff]
  %v34 = vld [vmem:[%s0 + $0x2c] sm:$0xf]
  %v35 = vld [vmem:[%s0 + $0x30] sm:$0xff]
  %v36 = vld [vmem:[%s0 + $0x38] sm:$0xf]
  %v37 = vld [vmem:[%s0 + $0x3c] sm:$0xff]
  %v38 = vld [vmem:[%s0 + $0x44] sm:$0xf]
  %v39 = vld [vmem:[%s0 + $0x48] sm:$0xff]
  %v40 = vld [vmem:[%s0 + $0x50] sm:$0xf]
  %v41 = vld [vmem:[%s0 + $0x54] sm:$0xff]
  %v42 = vld [vmem:[%s0 + $0x5c] sm:$0xf]
  %v43 = vld [vmem:[%s1] sm:$0xf]
  %v44 = vld [vmem:[%s1 + $0x4] sm:$0xf]
  %v45 = vld [vmem:[%s1 + $0x8] sm:$0xf]
  %v46 = vld [vmem:[%s1 + $0xc] sm:$0xf]
  %v47 = vld [vmem:[%s1 + $0x10] sm:$0xf]
  %v48 = vld [vmem:[%s1 + $0x14] sm:$0xf]
  %v49 = vld [vmem:[%s1 + $0x18] sm:$0xf]
  %v50 = vld [vmem:[%s1 + $0x1c] sm:$0xf]
  %v51 = vld [vmem:[%s1 + $0x20] sm:$0xf]
  %v52 = vld [vmem:[%s1 + $0x24] sm:$0xf]
  %v53 = vld [vmem:[%s1 + $0x28] sm:$0xf]
  %v54 = vld [vmem:[%s1 + $0x2c] sm:$0xf]
  %v55 = vld [vmem:[%s1 + $0x30] sm:$0xf]
  %v56 = vld [vmem:[%s1 + $0x34] sm:$0xf]
  %v57 = vld [vmem:[%s1 + $0x38] sm:$0xf]
  %v58 = vld [vmem:[%s1 + $0x3c] sm:$0xf]
  %v59 = vld [vmem:[%s1 + $0x40] sm:$0xf]
  %v60 = vld [vmem:[%s1 + $0x44] sm:$0xf]
  %v61 = vld [vmem:[%s1 + $0x48] sm:$0xf]
  %v62 = vld [vmem:[%s1 + $0x4c] sm:$0xf]
  %v63 = vld [vmem:[%s1 + $0x50] sm:$0xf]
  %v64 = vld [vmem:[%s1 + $0x54] sm:$0xf]
  %v65 = vld [vmem:[%s1 + $0x58] sm:$0xf]
  %v66 = vld [vmem:[%s1 + $0x5c] sm:$0xf]
  %v67 = vld [vmem:[%s1 + $0x60] sm:$0xf]
  %v68 = vld [vmem:[%s1 + $0x64] sm:$0xf]
  %v69 = vld [vmem:[%s1 + $0x68] sm:$0xf]
  %v70 = vld [vmem:[%s1 + $0x6c] sm:$0xf]
  %v71 = vld [vmem:[%s1 + $0x70] sm:$0xf]
  %v72 = vld [vmem:[%s1 + $0x74] sm:$0xf]
  %v73 = vld [vmem:[%s1 + $0x78] sm:$0xf]
  %v74 = vld [vmem:[%s1 + $0x7c] sm:$0xf]
  %v75 = vld [vmem:[%s1 + $0x80] sm:$0xf]
  %v76 = vld [vmem:[%s1 + $0x84] sm:$0xf]
  %v77 = vld [vmem:[%s1 + $0x88] sm:$0xf]
  %v78 = vld [vmem:[%s1 + $0x8c] sm:$0xf]
  %v79 = vld [vmem:[%s1 + $0x90] sm:$0xf]
  %v80 = vld [vmem:[%s1 + $0x94] sm:$0xf]
  %v81 = vld [vmem:[%s1 + $0x98] sm:$0xf]
  %v82 = vld [vmem:[%s1 + $0x9c] sm:$0xf]
  %v83 = vld [vmem:[%s1 + $0xa0] sm:$0xf]
  %v84 = vld [vmem:[%s1 + $0xa4] sm:$0xf]
  %v85 = vld [vmem:[%s1 + $0xa8] sm:$0xf]
  %v86 = vld [vmem:[%s1 + $0xac] sm:$0xf]
  %v87 = vld [vmem:[%s1 + $0xb0] sm:$0xf]
  %v88 = vld [vmem:[%s1 + $0xb4] sm:$0xf]
  %v89 = vld [vmem:[%s1 + $0xb8] sm:$0xf]
  %v90 = vld [vmem:[%s1 + $0xbc] sm:$0xf]
  %v91 = vld [vmem:[%s2] sm:$0x1]
  %v93 = vlaneseq
  %v94 = vshrl.u32 %v93, 7
  %v95 = vsub.s32 0, %v94
  %v96 = vrot.slane %v91, %v95
  %v114 = vunpack.c.l.b16 %v27
  %v115 = vunpack.c.h.b16 %v27
  %v116 = vunpack.c.l.b16 %v28
  %v117 = vunpack.c.l.b16 %v29
  %v118 = vunpack.c.h.b16 %v29
  %v119 = vunpack.c.l.b16 %v30
  %v120 = vunpack.c.l.b16 %v31
  %v121 = vunpack.c.h.b16 %v31
  %v122 = vunpack.c.l.b16 %v32
  %v123 = vunpack.c.l.b16 %v33
  %v124 = vunpack.c.h.b16 %v33
  %v125 = vunpack.c.l.b16 %v34
  %v126 = vunpack.c.l.b16 %v35
  %v127 = vunpack.c.h.b16 %v35
  %v128 = vunpack.c.l.b16 %v36
  %v129 = vunpack.c.l.b16 %v37
  %v130 = vunpack.c.h.b16 %v37
  %v131 = vunpack.c.l.b16 %v38
  %v132 = vunpack.c.l.b16 %v39
  %v133 = vunpack.c.h.b16 %v39
  %v134 = vunpack.c.l.b16 %v40
  %v135 = vunpack.c.l.b16 %v41
  %v136 = vunpack.c.h.b16 %v41
  %v137 = vunpack.c.l.b16 %v42
  %v138 = vpack.c.b16 %v117, %v114
  %v139 = vpack.c.b16 %v118, %v115
  %v140 = vpack.c.b16 %v119, %v116
  %v141 = vpack.c.b16 %v123, %v120
  %v142 = vpack.c.b16 %v124, %v121
  %v143 = vpack.c.b16 %v125, %v122
  %v144 = vpack.c.b16 %v129, %v126
  %v145 = vpack.c.b16 %v130, %v127
  %v146 = vpack.c.b16 %v131, %v128
  %v147 = vpack.c.b16 %v135, %v132
  %v148 = vpack.c.b16 %v136, %v133
  %v149 = vpack.c.b16 %v137, %v134
  %v210 = vunpack.c.l.b16 %v43
  %v211 = vunpack.c.l.b16 %v44
  %v212 = vunpack.c.l.b16 %v45
  %v213 = vunpack.c.l.b16 %v46
  %v214 = vunpack.c.l.b16 %v47
  %v215 = vunpack.c.l.b16 %v48
  %v216 = vunpack.c.l.b16 %v49
  %v217 = vunpack.c.l.b16 %v50
  %v218 = vunpack.c.l.b16 %v51
  %v219 = vunpack.c.l.b16 %v52
  %v220 = vunpack.c.l.b16 %v53
  %v221 = vunpack.c.l.b16 %v54
  %v222 = vunpack.c.l.b16 %v55
  %v223 = vunpack.c.l.b16 %v56
  %v224 = vunpack.c.l.b16 %v57
  %v225 = vunpack.c.l.b16 %v58
  %v226 = vunpack.c.l.b16 %v59
  %v227 = vunpack.c.l.b16 %v60
  %v228 = vunpack.c.l.b16 %v61
  %v229 = vunpack.c.l.b16 %v62
  %v230 = vunpack.c.l.b16 %v63
  %v231 = vunpack.c.l.b16 %v64
  %v232 = vunpack.c.l.b16 %v65
  %v233 = vunpack.c.l.b16 %v66
  %v234 = vunpack.c.l.b16 %v67
  %v235 = vunpack.c.l.b16 %v68
  %v236 = vunpack.c.l.b16 %v69
  %v237 = vunpack.c.l.b16 %v70
  %v238 = vunpack.c.l.b16 %v71
  %v239 = vunpack.c.l.b16 %v72
  %v240 = vunpack.c.l.b16 %v73
  %v241 = vunpack.c.l.b16 %v74
  %v242 = vunpack.c.l.b16 %v75
  %v243 = vunpack.c.l.b16 %v76
  %v244 = vunpack.c.l.b16 %v77
  %v245 = vunpack.c.l.b16 %v78
  %v246 = vunpack.c.l.b16 %v79
  %v247 = vunpack.c.l.b16 %v80
  %v248 = vunpack.c.l.b16 %v81
  %v249 = vunpack.c.l.b16 %v82
  %v250 = vunpack.c.l.b16 %v83
  %v251 = vunpack.c.l.b16 %v84
  %v252 = vunpack.c.l.b16 %v85
  %v253 = vunpack.c.l.b16 %v86
  %v254 = vunpack.c.l.b16 %v87
  %v255 = vunpack.c.l.b16 %v88
  %v256 = vunpack.c.l.b16 %v89
  %v257 = vunpack.c.l.b16 %v90
  %v258 = vpack.c.b16 %v211, %v210
  %v259 = vpack.c.b16 %v213, %v212
  %v260 = vpack.c.b16 %v215, %v214
  %v261 = vpack.c.b16 %v217, %v216
  %v262 = vpack.c.b16 %v219, %v218
  %v263 = vpack.c.b16 %v221, %v220
  %v264 = vpack.c.b16 %v223, %v222
  %v265 = vpack.c.b16 %v225, %v224
  %v266 = vpack.c.b16 %v227, %v226
  %v267 = vpack.c.b16 %v229, %v228
  %v268 = vpack.c.b16 %v231, %v230
  %v269 = vpack.c.b16 %v233, %v232
  %v270 = vpack.c.b16 %v235, %v234
  %v271 = vpack.c.b16 %v237, %v236
  %v272 = vpack.c.b16 %v239, %v238
  %v273 = vpack.c.b16 %v241, %v240
  %v274 = vpack.c.b16 %v243, %v242
  %v275 = vpack.c.b16 %v245, %v244
  %v276 = vpack.c.b16 %v247, %v246
  %v277 = vpack.c.b16 %v249, %v248
  %v278 = vpack.c.b16 %v251, %v250
  %v279 = vpack.c.b16 %v253, %v252
  %v280 = vpack.c.b16 %v255, %v254
  %v281 = vpack.c.b16 %v257, %v256
  %306 = vmatprep.subr.bf16.mxu0 0
  %307 = vmatpush1.bf16.msra.mxu0 %v258
  %308 = vmatprep.subr.bf16.mxu0 0
  %309 = vmatpush1.bf16.msra.mxu0 %v259
  %310 = vmatprep.subr.bf16.mxu0 0
  %311 = vmatpush1.bf16.msra.mxu0 %v260
  %312 = vmatprep.subr.bf16.mxu0 0
  %313 = vmatpush1.bf16.msra.mxu0 %v261
  %314 = vmatprep.subr.bf16.mxu0 0
  %315 = vmatpush1.bf16.msra.mxu0 %v262
  %316 = vmatprep.subr.bf16.mxu0 0
  %317 = vmatpush1.bf16.msra.mxu0 %v263
  %318 = vmatprep.subr.bf16.mxu0 0
  %319 = vmatpush1.bf16.msra.mxu0 %v264
  %320 = vmatprep.subr.bf16.mxu0 0
  %321 = vmatpush1.bf16.msra.mxu0 %v265
  %322 = vmatprep.subr.bf16.mxu0 0
  %323 = vmatpush1.bf16.msra.mxu0 %v266
  %324 = vmatprep.subr.bf16.mxu0 0
  %325 = vmatpush1.bf16.msra.mxu0 %v267
  %326 = vmatprep.subr.bf16.mxu0 0
  %327 = vmatpush1.bf16.msra.mxu0 %v268
  %328 = vmatprep.subr.bf16.mxu0 0
  %329 = vmatpush1.bf16.msra.mxu0 %v269
  %330 = vmatprep.subr.bf16.mxu0 0
  %331 = vmatpush1.bf16.msra.mxu0 %v270
  %332 = vmatprep.subr.bf16.mxu0 0
  %333 = vmatpush1.bf16.msra.mxu0 %v271
  %334 = vmatprep.subr.bf16.mxu0 0
  %335 = vmatpush1.bf16.msra.mxu0 %v272
  %336 = vmatprep.subr.bf16.mxu0 0
  %337 = vmatpush1.bf16.msra.mxu0 %v273
  %338 = vmatprep.mubr.bf16.mxu0 %v139
  %339 = vmatmul.mubr.bf16.gmra.mrb[0].mxu0 %v138
  %v340 = vpop.f32.mrb[0].mxu0
  %v341 = vadd.f32 %v96, %v340
  %v342 = vpop.f32.mrb[0].mxu0
  %v343 = vpop.f32.mrb[0].mxu0
  %v344 = vadd.f32 %v96, %v343
  %v345 = vpop.f32.mrb[0].mxu0
  %346 = vmatprep.mubr.bf16.mxu0 %v142
  %347 = vmatmul.mubr.bf16.gmra.mrb[0].mxu0 %v141
  %v348 = vpop.f32.mrb[0].mxu0
  %v349 = vadd.f32 %v96, %v348
  %v350 = vpop.f32.mrb[0].mxu0
  %v351 = vpop.f32.mrb[0].mxu0
  %v352 = vadd.f32 %v96, %v351
  %v353 = vpop.f32.mrb[0].mxu0
  %354 = vmatprep.mubr.bf16.mxu0 %v145
  %355 = vmatmul.mubr.bf16.gmra.mrb[0].mxu0 %v144
  %v356 = vpop.f32.mrb[0].mxu0
  %v357 = vadd.f32 %v96, %v356
  %v358 = vpop.f32.mrb[0].mxu0
  %v359 = vpop.f32.mrb[0].mxu0
  %v360 = vadd.f32 %v96, %v359
  %v361 = vpop.f32.mrb[0].mxu0
  %362 = vmatprep.mubr.bf16.mxu0 %v148
  %363 = vmatmul.mubr.bf16.gmra.mrb[0].mxu0 %v147
  %v364 = vpop.f32.mrb[0].mxu0
  %v365 = vadd.f32 %v96, %v364
  %v366 = vpop.f32.mrb[0].mxu0
  %v367 = vpop.f32.mrb[0].mxu0
  %v368 = vadd.f32 %v96, %v367
  %v369 = vpop.f32.mrb[0].mxu0
  %370 = vdwg.mxu0
  %371 = vmatprep.subr.bf16.mxu0 0
  %372 = vmatpush1.bf16.msra.mxu0 %v274
  %373 = vmatprep.subr.bf16.mxu0 0
  %374 = vmatpush1.bf16.msra.mxu0 %v275
  %375 = vmatprep.subr.bf16.mxu0 0
  %376 = vmatpush1.bf16.msra.mxu0 %v276
  %377 = vmatprep.subr.bf16.mxu0 0
  %378 = vmatpush1.bf16.msra.mxu0 %v277
  %379 = vmatprep.subr.bf16.mxu0 0
  %380 = vmatpush1.bf16.msra.mxu0 %v278
  %381 = vmatprep.subr.bf16.mxu0 0
  %382 = vmatpush1.bf16.msra.mxu0 %v279
  %383 = vmatprep.subr.bf16.mxu0 0
  %384 = vmatpush1.bf16.msra.mxu0 %v280
  %385 = vmatprep.subr.bf16.mxu0 0
  %386 = vmatpush1.bf16.msra.mxu0 %v281
  %387 = vmatprep.subr.bf16.mxu0 0
  %388 = vmatpush1.bf16.msra.mxu0 0
  %389 = vmatprep.subr.bf16.mxu0 0
  %390 = vmatpush1.bf16.msra.mxu0 0
  %391 = vmatprep.subr.bf16.mxu0 0
  %392 = vmatpush1.bf16.msra.mxu0 0
  %393 = vmatprep.subr.bf16.mxu0 0
  %394 = vmatpush1.bf16.msra.mxu0 0
  %395 = vmatprep.subr.bf16.mxu0 0
  %396 = vmatpush1.bf16.msra.mxu0 0
  %397 = vmatprep.subr.bf16.mxu0 0
  %398 = vmatpush1.bf16.msra.mxu0 0
  %399 = vmatprep.subr.bf16.mxu0 0
  %400 = vmatpush1.bf16.msra.mxu0 0
  %401 = vmatprep.subr.bf16.mxu0 0
  %402 = vmatpush1.bf16.msra.mxu0 0
  %403 = vmatprep.mubr.bf16.mxu0 0
  %404 = vmatmul.mubr.bf16.gmra.mrb[0].mxu0 %v140
  %v405 = vpop.f32.mrb[0].mxu0
  %v406 = vadd.f32 %v341, %v405
  %v407 = vpop.f32.mrb[0].mxu0
  %v408 = vpop.f32.mrb[0].mxu0
  %v409 = vadd.f32 %v344, %v408
  %v410 = vpop.f32.mrb[0].mxu0
  %411 = vmatprep.mubr.bf16.mxu0 0
  %412 = vmatmul.mubr.bf16.gmra.mrb[0].mxu0 %v143
  %v413 = vpop.f32.mrb[0].mxu0
  %v414 = vadd.f32 %v349, %v413
  %v415 = vpop.f32.mrb[0].mxu0
  %v416 = vpop.f32.mrb[0].mxu0
  %v417 = vadd.f32 %v352, %v416
  %v418 = vpop.f32.mrb[0].mxu0
  %419 = vmatprep.mubr.bf16.mxu0 0
  %420 = vmatmul.mubr.bf16.gmra.mrb[0].mxu0 %v146
  %v421 = vpop.f32.mrb[0].mxu0
  %v422 = vadd.f32 %v357, %v421
  %v423 = vpop.f32.mrb[0].mxu0
  %v424 = vpop.f32.mrb[0].mxu0
  %v425 = vadd.f32 %v360, %v424
  %v426 = vpop.f32.mrb[0].mxu0
  %427 = vmatprep.mubr.bf16.mxu0 0
  %428 = vmatmul.mubr.bf16.gmra.mrb[0].mxu0 %v149
  %v429 = vpop.f32.mrb[0].mxu0
  %v430 = vadd.f32 %v365, %v429
  %v431 = vpop.f32.mrb[0].mxu0
  %v432 = vpop.f32.mrb[0].mxu0
  %v433 = vadd.f32 %v368, %v432
  %v434 = vpop.f32.mrb[0].mxu0
  %435 = vdwg.mxu0
  %v436 = vpack.c.bf16 %v409, %v406
  %v437 = vpack.c.bf16 %v417, %v414
  %v438 = vpack.c.bf16 %v425, %v422
  %v439 = vpack.c.bf16 %v433, %v430
  %v440 = vld [vmem:[%s3] sm:$0xff]
  %v441 = vld [vmem:[%s3 + $0x8] sm:$0xff]
  %v442 = vld [vmem:[%s3 + $0x10] sm:$0xff]
  %v443 = vld [vmem:[%s3 + $0x18] sm:$0xff]
  %v444 = vld [vmem:[%s3 + $0x20] sm:$0xff]
  %v445 = vld [vmem:[%s3 + $0x28] sm:$0xff]
  %v446 = vld [vmem:[%s3 + $0x30] sm:$0xff]
  %v447 = vld [vmem:[%s3 + $0x38] sm:$0xff]
  %v448 = vld [vmem:[%s3 + $0x40] sm:$0xff]
  %v449 = vld [vmem:[%s3 + $0x48] sm:$0xff]
  %v450 = vld [vmem:[%s3 + $0x50] sm:$0xff]
  %v451 = vld [vmem:[%s3 + $0x58] sm:$0xff]
  %v452 = vld [vmem:[%s3 + $0x60] sm:$0xff]
  %v453 = vld [vmem:[%s3 + $0x68] sm:$0xff]
  %v454 = vld [vmem:[%s3 + $0x70] sm:$0xff]
  %v455 = vld [vmem:[%s3 + $0x78] sm:$0xff]
  %v456 = vld [vmem:[%s4] sm:$0x3]
  %v458 = vlaneseq
  %v459 = vshrl.u32 %v458, 7
  %v460 = vsub.s32 0, %v459
  %v461 = vrot.slane %v456, %v460
  %v462 = vlaneseq
  %v463 = vshrl.u32 %v462, 7
  %v464 = vsub.s32 1, %v463
  %v465 = vrot.slane %v456, %v464
  %v484 = vunpack.c.l.b16 %v440
  %v485 = vunpack.c.h.b16 %v440
  %v486 = vunpack.c.l.b16 %v441
  %v487 = vunpack.c.h.b16 %v441
  %v488 = vunpack.c.l.b16 %v442
  %v489 = vunpack.c.h.b16 %v442
  %v490 = vunpack.c.l.b16 %v443
  %v491 = vunpack.c.h.b16 %v443
  %v492 = vunpack.c.l.b16 %v444
  %v493 = vunpack.c.h.b16 %v444
  %v494 = vunpack.c.l.b16 %v445
  %v495 = vunpack.c.h.b16 %v445
  %v496 = vunpack.c.l.b16 %v446
  %v497 = vunpack.c.h.b16 %v446
  %v498 = vunpack.c.l.b16 %v447
  %v499 = vunpack.c.h.b16 %v447
  %v500 = vunpack.c.l.b16 %v448
  %v501 = vunpack.c.h.b16 %v448
  %v502 = vunpack.c.l.b16 %v449
  %v503 = vunpack.c.h.b16 %v449
  %v504 = vunpack.c.l.b16 %v450
  %v505 = vunpack.c.h.b16 %v450
  %v506 = vunpack.c.l.b16 %v451
  %v507 = vunpack.c.h.b16 %v451
  %v508 = vunpack.c.l.b16 %v452
  %v509 = vunpack.c.h.b16 %v452
  %v510 = vunpack.c.l.b16 %v453
  %v511 = vunpack.c.h.b16 %v453
  %v512 = vunpack.c.l.b16 %v454
  %v513 = vunpack.c.h.b16 %v454
  %v514 = vunpack.c.l.b16 %v455
  %v515 = vunpack.c.h.b16 %v455
  %v516 = vpack.c.b16 %v486, %v484
  %v517 = vpack.c.b16 %v487, %v485
  %v518 = vpack.c.b16 %v490, %v488
  %v519 = vpack.c.b16 %v491, %v489
  %v520 = vpack.c.b16 %v494, %v492
  %v521 = vpack.c.b16 %v495, %v493
  %v522 = vpack.c.b16 %v498, %v496
  %v523 = vpack.c.b16 %v499, %v497
  %v524 = vpack.c.b16 %v502, %v500
  %v525 = vpack.c.b16 %v503, %v501
  %v526 = vpack.c.b16 %v506, %v504
  %v527 = vpack.c.b16 %v507, %v505
  %v528 = vpack.c.b16 %v510, %v508
  %v529 = vpack.c.b16 %v511, %v509
  %v530 = vpack.c.b16 %v514, %v512
  %v531 = vpack.c.b16 %v515, %v513
  %548 = vmatprep.subr.bf16.mxu0 %v517
  %549 = vmatpush1.bf16.msra.mxu0 %v516
  %550 = vmatprep.subr.bf16.mxu0 %v519
  %551 = vmatpush1.bf16.msra.mxu0 %v518
  %552 = vmatprep.subr.bf16.mxu0 %v521
  %553 = vmatpush1.bf16.msra.mxu0 %v520
  %554 = vmatprep.subr.bf16.mxu0 %v523
  %555 = vmatpush1.bf16.msra.mxu0 %v522
  %556 = vmatprep.subr.bf16.mxu0 %v525
  %557 = vmatpush1.bf16.msra.mxu0 %v524
  %558 = vmatprep.subr.bf16.mxu0 %v527
  %559 = vmatpush1.bf16.msra.mxu0 %v526
  %560 = vmatprep.subr.bf16.mxu0 %v529
  %561 = vmatpush1.bf16.msra.mxu0 %v528
  %562 = vmatprep.subr.bf16.mxu0 %v531
  %563 = vmatpush1.bf16.msra.mxu0 %v530
  %564 = vmatprep.subr.bf16.mxu0 0
  %565 = vmatpush1.bf16.msra.mxu0 0
  %566 = vmatprep.subr.bf16.mxu0 0
  %567 = vmatpush1.bf16.msra.mxu0 0
  %568 = vmatprep.subr.bf16.mxu0 0
  %569 = vmatpush1.bf16.msra.mxu0 0
  %570 = vmatprep.subr.bf16.mxu0 0
  %571 = vmatpush1.bf16.msra.mxu0 0
  %572 = vmatprep.subr.bf16.mxu0 0
  %573 = vmatpush1.bf16.msra.mxu0 0
  %574 = vmatprep.subr.bf16.mxu0 0
  %575 = vmatpush1.bf16.msra.mxu0 0
  %576 = vmatprep.subr.bf16.mxu0 0
  %577 = vmatpush1.bf16.msra.mxu0 0
  %578 = vmatprep.subr.bf16.mxu0 0
  %579 = vmatpush1.bf16.msra.mxu0 0
  %580 = vmatprep.mubr.bf16.mxu0 0
  %581 = vmatmul.mubr.bf16.gmra.mrb[0].mxu0 %v436
  %v582 = vpop.f32.mrb[0].mxu0
  %v583 = vadd.f32 %v461, %v582
  %v584 = vpop.f32.mrb[0].mxu0
  %v585 = vadd.f32 %v465, %v584
  %v586 = vpop.f32.mrb[0].mxu0
  %v587 = vadd.f32 %v461, %v586
  %v588 = vpop.f32.mrb[0].mxu0
  %v589 = vadd.f32 %v465, %v588
  %590 = vmatprep.mubr.bf16.mxu0 0
  %591 = vmatmul.mubr.bf16.gmra.mrb[0].mxu0 %v437
  %v592 = vpop.f32.mrb[0].mxu0
  %v593 = vadd.f32 %v461, %v592
  %v594 = vpop.f32.mrb[0].mxu0
  %v595 = vadd.f32 %v465, %v594
  %v596 = vpop.f32.mrb[0].mxu0
  %v597 = vadd.f32 %v461, %v596
  %v598 = vpop.f32.mrb[0].mxu0
  %v599 = vadd.f32 %v465, %v598
  %600 = vmatprep.mubr.bf16.mxu0 0
  %601 = vmatmul.mubr.bf16.gmra.mrb[0].mxu0 %v438
  %v602 = vpop.f32.mrb[0].mxu0
  %v603 = vadd.f32 %v461, %v602
  %v604 = vpop.f32.mrb[0].mxu0
  %v605 = vadd.f32 %v465, %v604
  %v606 = vpop.f32.mrb[0].mxu0
  %v607 = vadd.f32 %v461, %v606
  %v608 = vpop.f32.mrb[0].mxu0
  %v609 = vadd.f32 %v465, %v608
  %610 = vmatprep.mubr.bf16.mxu0 0
  %611 = vmatmul.mubr.bf16.gmra.mrb[0].mxu0 %v439
  %v612 = vpop.f32.mrb[0].mxu0
  %v613 = vadd.f32 %v461, %v612
  %v614 = vpop.f32.mrb[0].mxu0
  %v615 = vadd.f32 %v465, %v614
  %v616 = vpop.f32.mrb[0].mxu0
  %v617 = vadd.f32 %v461, %v616
  %v618 = vpop.f32.mrb[0].mxu0
  %v619 = vadd.f32 %v465, %v618
  %620 = vdwg.mxu0
  %v621 = vmax.f32 %v583, 0.0
  %v622 = vmax.f32 %v585, 0.0
  %v623 = vmax.f32 %v587, 0.0
  %v624 = vmax.f32 %v589, 0.0
  %v625 = vmax.f32 %v593, 0.0
  %v626 = vmax.f32 %v595, 0.0
  %v627 = vmax.f32 %v597, 0.0
  %v628 = vmax.f32 %v599, 0.0
  %v629 = vmax.f32 %v603, 0.0
  %v630 = vmax.f32 %v605, 0.0
  %v631 = vmax.f32 %v607, 0.0
  %v632 = vmax.f32 %v609, 0.0
  %v633 = vmax.f32 %v613, 0.0
  %v634 = vmax.f32 %v615, 0.0
  %v635 = vmax.f32 %v617, 0.0
  %v636 = vmax.f32 %v619, 0.0
  %v637 = vpack.c.bf16 %v623, %v621
  %v638 = vpack.c.bf16 %v624, %v622
  %v639 = vpack.c.bf16 %v627, %v625
  %v640 = vpack.c.bf16 %v628, %v626
  %v641 = vpack.c.bf16 %v631, %v629
  %v642 = vpack.c.bf16 %v632, %v630
  %v643 = vpack.c.bf16 %v635, %v633
  %v644 = vpack.c.bf16 %v636, %v634
  %v645 = vld [vmem:[%s5] sm:$0xf]
  %v646 = vld [vmem:[%s5 + $0x4] sm:$0xf]
  %v647 = vld [vmem:[%s5 + $0x8] sm:$0xf]
  %v648 = vld [vmem:[%s5 + $0xc] sm:$0xf]
  %v649 = vld [vmem:[%s5 + $0x10] sm:$0xf]
  %v650 = vld [vmem:[%s5 + $0x14] sm:$0xf]
  %v651 = vld [vmem:[%s5 + $0x18] sm:$0xf]
  %v652 = vld [vmem:[%s5 + $0x1c] sm:$0xf]
  %v653 = vld [vmem:[%s5 + $0x20] sm:$0xf]
  %v654 = vld [vmem:[%s5 + $0x24] sm:$0xf]
  %v655 = vld [vmem:[%s5 + $0x28] sm:$0xf]
  %v656 = vld [vmem:[%s5 + $0x2c] sm:$0xf]
  %v657 = vld [vmem:[%s5 + $0x30] sm:$0xf]
  %v658 = vld [vmem:[%s5 + $0x34] sm:$0xf]
  %v659 = vld [vmem:[%s5 + $0x38] sm:$0xf]
  %v660 = vld [vmem:[%s5 + $0x3c] sm:$0xf]
  %v661 = vld [vmem:[%s5 + $0x40] sm:$0xf]
  %v662 = vld [vmem:[%s5 + $0x44] sm:$0xf]
  %v663 = vld [vmem:[%s5 + $0x48] sm:$0xf]
  %v664 = vld [vmem:[%s5 + $0x4c] sm:$0xf]
  %v665 = vld [vmem:[%s5 + $0x50] sm:$0xf]
  %v666 = vld [vmem:[%s5 + $0x54] sm:$0xf]
  %v667 = vld [vmem:[%s5 + $0x58] sm:$0xf]
  %v668 = vld [vmem:[%s5 + $0x5c] sm:$0xf]
  %v669 = vld [vmem:[%s5 + $0x60] sm:$0xf]
  %v670 = vld [vmem:[%s5 + $0x64] sm:$0xf]
  %v671 = vld [vmem:[%s5 + $0x68] sm:$0xf]
  %v672 = vld [vmem:[%s5 + $0x6c] sm:$0xf]
  %v673 = vld [vmem:[%s5 + $0x70] sm:$0xf]
  %v674 = vld [vmem:[%s5 + $0x74] sm:$0xf]
  %v675 = vld [vmem:[%s5 + $0x78] sm:$0xf]
  %v676 = vld [vmem:[%s5 + $0x7c] sm:$0xf]
  %v709 = vunpack.c.l.b16 %v645
  %v710 = vunpack.c.l.b16 %v646
  %v711 = vunpack.c.l.b16 %v647
  %v712 = vunpack.c.l.b16 %v648
  %v713 = vunpack.c.l.b16 %v649
  %v714 = vunpack.c.l.b16 %v650
  %v715 = vunpack.c.l.b16 %v651
  %v716 = vunpack.c.l.b16 %v652
  %v717 = vunpack.c.l.b16 %v653
  %v718 = vunpack.c.l.b16 %v654
  %v719 = vunpack.c.l.b16 %v655
  %v720 = vunpack.c.l.b16 %v656
  %v721 = vunpack.c.l.b16 %v657
  %v722 = vunpack.c.l.b16 %v658
  %v723 = vunpack.c.l.b16 %v659
  %v724 = vunpack.c.l.b16 %v660
  %v725 = vunpack.c.l.b16 %v661
  %v726 = vunpack.c.l.b16 %v662
  %v727 = vunpack.c.l.b16 %v663
  %v728 = vunpack.c.l.b16 %v664
  %v729 = vunpack.c.l.b16 %v665
  %v730 = vunpack.c.l.b16 %v666
  %v731 = vunpack.c.l.b16 %v667
  %v732 = vunpack.c.l.b16 %v668
  %v733 = vunpack.c.l.b16 %v669
  %v734 = vunpack.c.l.b16 %v670
  %v735 = vunpack.c.l.b16 %v671
  %v736 = vunpack.c.l.b16 %v672
  %v737 = vunpack.c.l.b16 %v673
  %v738 = vunpack.c.l.b16 %v674
  %v739 = vunpack.c.l.b16 %v675
  %v740 = vunpack.c.l.b16 %v676
  %v741 = vpack.c.b16 %v710, %v709
  %v742 = vpack.c.b16 %v712, %v711
  %v743 = vpack.c.b16 %v714, %v713
  %v744 = vpack.c.b16 %v716, %v715
  %v745 = vpack.c.b16 %v718, %v717
  %v746 = vpack.c.b16 %v720, %v719
  %v747 = vpack.c.b16 %v722, %v721
  %v748 = vpack.c.b16 %v724, %v723
  %v749 = vpack.c.b16 %v726, %v725
  %v750 = vpack.c.b16 %v728, %v727
  %v751 = vpack.c.b16 %v730, %v729
  %v752 = vpack.c.b16 %v732, %v731
  %v753 = vpack.c.b16 %v734, %v733
  %v754 = vpack.c.b16 %v736, %v735
  %v755 = vpack.c.b16 %v738, %v737
  %v756 = vpack.c.b16 %v740, %v739
  %773 = vmatprep.subr.bf16.mxu0 0
  %774 = vmatpush1.bf16.msra.mxu0 %v741
  %775 = vmatprep.subr.bf16.mxu0 0
  %776 = vmatpush1.bf16.msra.mxu0 %v742
  %777 = vmatprep.subr.bf16.mxu0 0
  %778 = vmatpush1.bf16.msra.mxu0 %v743
  %779 = vmatprep.subr.bf16.mxu0 0
  %780 = vmatpush1.bf16.msra.mxu0 %v744
  %781 = vmatprep.subr.bf16.mxu0 0
  %782 = vmatpush1.bf16.msra.mxu0 %v745
  %783 = vmatprep.subr.bf16.mxu0 0
  %784 = vmatpush1.bf16.msra.mxu0 %v746
  %785 = vmatprep.subr.bf16.mxu0 0
  %786 = vmatpush1.bf16.msra.mxu0 %v747
  %787 = vmatprep.subr.bf16.mxu0 0
  %788 = vmatpush1.bf16.msra.mxu0 %v748
  %789 = vmatprep.subr.bf16.mxu0 0
  %790 = vmatpush1.bf16.msra.mxu0 %v749
  %791 = vmatprep.subr.bf16.mxu0 0
  %792 = vmatpush1.bf16.msra.mxu0 %v750
  %793 = vmatprep.subr.bf16.mxu0 0
  %794 = vmatpush1.bf16.msra.mxu0 %v751
  %795 = vmatprep.subr.bf16.mxu0 0
  %796 = vmatpush1.bf16.msra.mxu0 %v752
  %797 = vmatprep.subr.bf16.mxu0 0
  %798 = vmatpush1.bf16.msra.mxu0 %v753
  %799 = vmatprep.subr.bf16.mxu0 0
  %800 = vmatpush1.bf16.msra.mxu0 %v754
  %801 = vmatprep.subr.bf16.mxu0 0
  %802 = vmatpush1.bf16.msra.mxu0 %v755
  %803 = vmatprep.subr.bf16.mxu0 0
  %804 = vmatpush1.bf16.msra.mxu0 %v756
  %805 = vmatprep.mubr.bf16.mxu0 %v638
  %806 = vmatmul.mubr.bf16.gmra.mrb[0].mxu0 %v637
  %v807 = vpop.f32.mrb[0].mxu0
  %v808 = vadd.f32 0.0, %v807
  %v809 = vpop.f32.mrb[0].mxu0
  %v810 = vpop.f32.mrb[0].mxu0
  %v811 = vadd.f32 0.0, %v810
  %v812 = vpop.f32.mrb[0].mxu0
  %813 = vmatprep.mubr.bf16.mxu0 %v640
  %814 = vmatmul.mubr.bf16.gmra.mrb[0].mxu0 %v639
  %v815 = vpop.f32.mrb[0].mxu0
  %v816 = vadd.f32 0.0, %v815
  %v817 = vpop.f32.mrb[0].mxu0
  %v818 = vpop.f32.mrb[0].mxu0
  %v819 = vadd.f32 0.0, %v818
  %v820 = vpop.f32.mrb[0].mxu0
  %821 = vmatprep.mubr.bf16.mxu0 %v642
  %822 = vmatmul.mubr.bf16.gmra.mrb[0].mxu0 %v641
  %v823 = vpop.f32.mrb[0].mxu0
  %v824 = vadd.f32 0.0, %v823
  %v825 = vpop.f32.mrb[0].mxu0
  %v826 = vpop.f32.mrb[0].mxu0
  %v827 = vadd.f32 0.0, %v826
  %v828 = vpop.f32.mrb[0].mxu0
  %829 = vmatprep.mubr.bf16.mxu0 %v644
  %830 = vmatmul.mubr.bf16.gmra.mrb[0].mxu0 %v643
  %v831 = vpop.f32.mrb[0].mxu0
  %v832 = vadd.f32 0.0, %v831
  %v833 = vpop.f32.mrb[0].mxu0
  %v834 = vpop.f32.mrb[0].mxu0
  %v835 = vadd.f32 0.0, %v834
  %v836 = vpop.f32.mrb[0].mxu0
  %837 = vdwg.mxu0
  %v838 = vadd.f32 %v406, %v808
  %v839 = vadd.f32 %v409, %v811
  %v840 = vadd.f32 %v414, %v816
  %v841 = vadd.f32 %v417, %v819
  %v842 = vadd.f32 %v422, %v824
  %v843 = vadd.f32 %v425, %v827
  %v844 = vadd.f32 %v430, %v832
  %v845 = vadd.f32 %v433, %v835
  %v846 = vld [vmem:[%s6] sm:$0x1]
  %v848 = vlaneseq
  %v849 = vshrl.u32 %v848, 7
  %v850 = vsub.s32 0, %v849
  %v851 = vrot.slane %v846, %v850
  %v853 = vadd.f32 %v838, %v851
  %v854 = vadd.f32 %v839, %v851
  %v855 = vadd.f32 %v840, %v851
  %v856 = vadd.f32 %v841, %v851
  %v857 = vadd.f32 %v842, %v851
  %v858 = vadd.f32 %v843, %v851
  %v859 = vadd.f32 %v844, %v851
  %v860 = vadd.f32 %v845, %v851
  %v861 = vpack.c.bf16 %v854, %v853
  %v862 = vpack.c.bf16 %v856, %v855
  %v863 = vpack.c.bf16 %v858, %v857
  %v864 = vpack.c.bf16 %v860, %v859
  %v869 = vunpack.c.l.b16 %v861
  %v870 = vunpack.c.h.b16 %v861
  %v871 = vunpack.c.l.b16 %v862
  %v872 = vunpack.c.h.b16 %v862
  %v873 = vunpack.c.l.b16 %v863
  %v874 = vunpack.c.h.b16 %v863
  %v875 = vunpack.c.l.b16 %v864
  %v876 = vunpack.c.h.b16 %v864
  %v877 = vpack.c.b16 %v869, %v869
  %v878 = vpack.c.b16 %v870, %v870
  %v879 = vpack.c.b16 %v871, %v871
  %v880 = vpack.c.b16 %v872, %v872
  %v881 = vpack.c.b16 %v873, %v873
  %v882 = vpack.c.b16 %v874, %v874
  %v883 = vpack.c.b16 %v875, %v875
  %v884 = vpack.c.b16 %v876, %v876
  %893 = vst [vmem:[%s7] sm:$0xf] %v877
  %894 = vst [vmem:[%s7 + $0x4] sm:$0xf] %v878
  %895 = vst [vmem:[%s7 + $0x8] sm:$0xf] %v879
  %896 = vst [vmem:[%s7 + $0xc] sm:$0xf] %v880
  %897 = vst [vmem:[%s7 + $0x10] sm:$0xf] %v881
  %898 = vst [vmem:[%s7 + $0x14] sm:$0xf] %v882
  %899 = vst [vmem:[%s7 + $0x18] sm:$0xf] %v883
  %900 = vst [vmem:[%s7 + $0x1c] sm:$0xf] %v884
  // Predicated region
  $region30: #{timm_model_forward.4} parent=0 // pred_check
    _
  $region31: #{timm_model_forward.4} parent=0 // pred_check_branch
    %902 = sbr.rel (0) target = $region33
  $region32: #{timm_model_forward.4} parent=0 // pred_region
    _
  $region33: #{timm_model_forward.4} parent=0 // pred_fallthru
    _
  // Predicated region
  $region34: #{timm_model_forward.4} parent=0 // pred_check
    _
  $region35: #{timm_model_forward.4} parent=0 // pred_check_branch
    %904 = sbr.rel (0) target = $region37
  $region36: #{timm_model_forward.4} parent=0 // pred_region
    _
  $region37: #{timm_model_forward.4} parent=0 // pred_fallthru
    _

// kernel: timm_model_forward.5
$region0: #{timm_model_forward.5}
  #allocation0 [shape = 'u32[]', space=smem, size = 0x4, offset = 0x4, fixed_abs, tag = 'smem constant byte address 0x4 - core index']
  #allocation1 [shape = 'u32[144,128]{1,0:T(1,128)}', space=vmem, size = 0x12000, scoped, tag = 'internal scratch']
  %s0 = inlined_call_operand.vmem [shape: bf16[32,256], index: 0, kind: input, shape index: {}]
  %s1 = inlined_call_operand.vmem [shape: bf16[256,128], index: 1, kind: input, shape index: {}]
  %s2 = inlined_call_operand.vmem [shape: f32[1,128], index: 2, kind: input, shape index: {}]
  %s3 = inlined_call_operand.vmem [shape: bf16[128,256], index: 3, kind: input, shape index: {}]
  %s4 = inlined_call_operand.vmem [shape: f32[1,256], index: 4, kind: input, shape index: {}]
  %s5 = inlined_call_operand.vmem [shape: bf16[256,128], index: 5, kind: input, shape index: {}]
  %s6 = inlined_call_operand.vmem [shape: f32[1,128], index: 6, kind: input, shape index: {}]
  %s7 = inlined_call_operand.vmem [shape: bf16[32,128], index: 7, kind: output, shape index: {}]
  %s8 = sld [smem:[#allocation0]]
  $region38: #{timm_model_forward.5} parent=0
    _
  %s10 = ssub.s32 1, %s8
  %s11 = scalar_select 0, %s10, %s8
  // Predicated region
  $region2: #{timm_model_forward.5} parent=0 // pred_check
    _
  $region3: #{timm_model_forward.5} parent=0 // pred_check_branch
    %13 = sbr.rel (0) target = $region5
  $region4: #{timm_model_forward.5} parent=0 // pred_region
    _
  $region5: #{timm_model_forward.5} parent=0 // pred_fallthru
    _
  // Predicated region
  $region6: #{timm_model_forward.5} parent=0 // pred_check
    _
  $region7: #{timm_model_forward.5} parent=0 // pred_check_branch
    %15 = sbr.rel (0) target = $region9
  $region8: #{timm_model_forward.5} parent=0 // pred_region
    _
  $region9: #{timm_model_forward.5} parent=0 // pred_fallthru
    _
  // Predicated region
  $region10: #{timm_model_forward.5} parent=0 // pred_check
    _
  $region11: #{timm_model_forward.5} parent=0 // pred_check_branch
    %17 = sbr.rel (0) target = $region13
  $region12: #{timm_model_forward.5} parent=0 // pred_region
    _
  $region13: #{timm_model_forward.5} parent=0 // pred_fallthru
    _
  // Predicated region
  $region14: #{timm_model_forward.5} parent=0 // pred_check
    _
  $region15: #{timm_model_forward.5} parent=0 // pred_check_branch
    %19 = sbr.rel (0) target = $region17
  $region16: #{timm_model_forward.5} parent=0 // pred_region
    _
  $region17: #{timm_model_forward.5} parent=0 // pred_fallthru
    _
  // Predicated region
  $region18: #{timm_model_forward.5} parent=0 // pred_check
    _
  $region19: #{timm_model_forward.5} parent=0 // pred_check_branch
    %21 = sbr.rel (0) target = $region21
  $region20: #{timm_model_forward.5} parent=0 // pred_region
    _
  $region21: #{timm_model_forward.5} parent=0 // pred_fallthru
    _
  // Predicated region
  $region22: #{timm_model_forward.5} parent=0 // pred_check
    _
  $region23: #{timm_model_forward.5} parent=0 // pred_check_branch
    %23 = sbr.rel (0) target = $region25
  $region24: #{timm_model_forward.5} parent=0 // pred_region
    _
  $region25: #{timm_model_forward.5} parent=0 // pred_fallthru
    _
  // Predicated region
  $region26: #{timm_model_forward.5} parent=0 // pred_check
    _
  $region27: #{timm_model_forward.5} parent=0 // pred_check_branch
    %25 = sbr.rel (0) target = $region29
  $region28: #{timm_model_forward.5} parent=0 // pred_region
    _
  $region29: #{timm_model_forward.5} parent=0 // pred_fallthru
    _
  %v27 = vld [vmem:[%s0] sm:$0xff]
  %v28 = vld [vmem:[%s0 + $0x8] sm:$0xff]
  %v29 = vld [vmem:[%s0 + $0x10] sm:$0xff]
  %v30 = vld [vmem:[%s0 + $0x18] sm:$0xff]
  %v31 = vld [vmem:[%s1] sm:$0xf]
  %v32 = vld [vmem:[%s1 + $0x4] sm:$0xf]
  %v33 = vld [vmem:[%s1 + $0x8] sm:$0xf]
  %v34 = vld [vmem:[%s1 + $0xc] sm:$0xf]
  %v35 = vld [vmem:[%s1 + $0x10] sm:$0xf]
  %v36 = vld [vmem:[%s1 + $0x14] sm:$0xf]
  %v37 = vld [vmem:[%s1 + $0x18] sm:$0xf]
  %v38 = vld [vmem:[%s1 + $0x1c] sm:$0xf]
  %v39 = vld [vmem:[%s1 + $0x20] sm:$0xf]
  %v40 = vld [vmem:[%s1 + $0x24] sm:$0xf]
  %v41 = vld [vmem:[%s1 + $0x28] sm:$0xf]
  %v42 = vld [vmem:[%s1 + $0x2c] sm:$0xf]
  %v43 = vld [vmem:[%s1 + $0x30] sm:$0xf]
  %v44 = vld [vmem:[%s1 + $0x34] sm:$0xf]
  %v45 = vld [vmem:[%s1 + $0x38] sm:$0xf]
  %v46 = vld [vmem:[%s1 + $0x3c] sm:$0xf]
  %v47 = vld [vmem:[%s1 + $0x40] sm:$0xf]
  %v48 = vld [vmem:[%s1 + $0x44] sm:$0xf]
  %v49 = vld [vmem:[%s1 + $0x48] sm:$0xf]
  %v50 = vld [vmem:[%s1 + $0x4c] sm:$0xf]
  %v51 = vld [vmem:[%s1 + $0x50] sm:$0xf]
  %v52 = vld [vmem:[%s1 + $0x54] sm:$0xf]
  %v53 = vld [vmem:[%s1 + $0x58] sm:$0xf]
  %v54 = vld [vmem:[%s1 + $0x5c] sm:$0xf]
  %v55 = vld [vmem:[%s1 + $0x60] sm:$0xf]
  %v56 = vld [vmem:[%s1 + $0x64] sm:$0xf]
  %v57 = vld [vmem:[%s1 + $0x68] sm:$0xf]
  %v58 = vld [vmem:[%s1 + $0x6c] sm:$0xf]
  %v59 = vld [vmem:[%s1 + $0x70] sm:$0xf]
  %v60 = vld [vmem:[%s1 + $0x74] sm:$0xf]
  %v61 = vld [vmem:[%s1 + $0x78] sm:$0xf]
  %v62 = vld [vmem:[%s1 + $0x7c] sm:$0xf]
  %v63 = vld [vmem:[%s2] sm:$0x1]
  %v65 = vlaneseq
  %v66 = vshrl.u32 %v65, 7
  %v67 = vsub.s32 0, %v66
  %v68 = vrot.slane %v63, %v67
  %v74 = vunpack.c.l.b16 %v27
  %v75 = vunpack.c.h.b16 %v27
  %v76 = vunpack.c.l.b16 %v28
  %v77 = vunpack.c.h.b16 %v28
  %v78 = vunpack.c.l.b16 %v29
  %v79 = vunpack.c.h.b16 %v29
  %v80 = vunpack.c.l.b16 %v30
  %v81 = vunpack.c.h.b16 %v30
  %v82 = vpack.c.b16 %v76, %v74
  %v83 = vpack.c.b16 %v77, %v75
  %v84 = vpack.c.b16 %v80, %v78
  %v85 = vpack.c.b16 %v81, %v79
  %v122 = vunpack.c.l.b16 %v31
  %v123 = vunpack.c.l.b16 %v32
  %v124 = vunpack.c.l.b16 %v33
  %v125 = vunpack.c.l.b16 %v34
  %v126 = vunpack.c.l.b16 %v35
  %v127 = vunpack.c.l.b16 %v36
  %v128 = vunpack.c.l.b16 %v37
  %v129 = vunpack.c.l.b16 %v38
  %v130 = vunpack.c.l.b16 %v39
  %v131 = vunpack.c.l.b16 %v40
  %v132 = vunpack.c.l.b16 %v41
  %v133 = vunpack.c.l.b16 %v42
  %v134 = vunpack.c.l.b16 %v43
  %v135 = vunpack.c.l.b16 %v44
  %v136 = vunpack.c.l.b16 %v45
  %v137 = vunpack.c.l.b16 %v46
  %v138 = vunpack.c.l.b16 %v47
  %v139 = vunpack.c.l.b16 %v48
  %v140 = vunpack.c.l.b16 %v49
  %v141 = vunpack.c.l.b16 %v50
  %v142 = vunpack.c.l.b16 %v51
  %v143 = vunpack.c.l.b16 %v52
  %v144 = vunpack.c.l.b16 %v53
  %v145 = vunpack.c.l.b16 %v54
  %v146 = vunpack.c.l.b16 %v55
  %v147 = vunpack.c.l.b16 %v56
  %v148 = vunpack.c.l.b16 %v57
  %v149 = vunpack.c.l.b16 %v58
  %v150 = vunpack.c.l.b16 %v59
  %v151 = vunpack.c.l.b16 %v60
  %v152 = vunpack.c.l.b16 %v61
  %v153 = vunpack.c.l.b16 %v62
  %v154 = vpack.c.b16 %v123, %v122
  %v155 = vpack.c.b16 %v125, %v124
  %v156 = vpack.c.b16 %v127, %v126
  %v157 = vpack.c.b16 %v129, %v128
  %v158 = vpack.c.b16 %v131, %v130
  %v159 = vpack.c.b16 %v133, %v132
  %v160 = vpack.c.b16 %v135, %v134
  %v161 = vpack.c.b16 %v137, %v136
  %v162 = vpack.c.b16 %v139, %v138
  %v163 = vpack.c.b16 %v141, %v140
  %v164 = vpack.c.b16 %v143, %v142
  %v165 = vpack.c.b16 %v145, %v144
  %v166 = vpack.c.b16 %v147, %v146
  %v167 = vpack.c.b16 %v149, %v148
  %v168 = vpack.c.b16 %v151, %v150
  %v169 = vpack.c.b16 %v153, %v152
  %186 = vmatprep.subr.bf16.mxu0 0
  %187 = vmatpush1.bf16.msra.mxu0 %v154
  %188 = vmatprep.subr.bf16.mxu0 0
  %189 = vmatpush1.bf16.msra.mxu0 %v155
  %190 = vmatprep.subr.bf16.mxu0 0
  %191 = vmatpush1.bf16.msra.mxu0 %v156
  %192 = vmatprep.subr.bf16.mxu0 0
  %193 = vmatpush1.bf16.msra.mxu0 %v157
  %194 = vmatprep.subr.bf16.mxu0 0
  %195 = vmatpush1.bf16.msra.mxu0 %v158
  %196 = vmatprep.subr.bf16.mxu0 0
  %197 = vmatpush1.bf16.msra.mxu0 %v159
  %198 = vmatprep.subr.bf16.mxu0 0
  %199 = vmatpush1.bf16.msra.mxu0 %v160
  %200 = vmatprep.subr.bf16.mxu0 0
  %201 = vmatpush1.bf16.msra.mxu0 %v161
  %202 = vmatprep.subr.bf16.mxu0 0
  %203 = vmatpush1.bf16.msra.mxu0 %v162
  %204 = vmatprep.subr.bf16.mxu0 0
  %205 = vmatpush1.bf16.msra.mxu0 %v163
  %206 = vmatprep.subr.bf16.mxu0 0
  %207 = vmatpush1.bf16.msra.mxu0 %v164
  %208 = vmatprep.subr.bf16.mxu0 0
  %209 = vmatpush1.bf16.msra.mxu0 %v165
  %210 = vmatprep.subr.bf16.mxu0 0
  %211 = vmatpush1.bf16.msra.mxu0 %v166
  %212 = vmatprep.subr.bf16.mxu0 0
  %213 = vmatpush1.bf16.msra.mxu0 %v167
  %214 = vmatprep.subr.bf16.mxu0 0
  %215 = vmatpush1.bf16.msra.mxu0 %v168
  %216 = vmatprep.subr.bf16.mxu0 0
  %217 = vmatpush1.bf16.msra.mxu0 %v169
  %218 = vmatprep.mubr.bf16.mxu0 %v83
  %219 = vmatmul.mubr.bf16.gmra.mrb[0].mxu0 %v82
  %v220 = vpop.f32.mrb[0].mxu0
  %v221 = vadd.f32 %v68, %v220
  %v222 = vpop.f32.mrb[0].mxu0
  %v223 = vpop.f32.mrb[0].mxu0
  %v224 = vadd.f32 %v68, %v223
  %v225 = vpop.f32.mrb[0].mxu0
  %226 = vmatprep.mubr.bf16.mxu0 %v85
  %227 = vmatmul.mubr.bf16.gmra.mrb[0].mxu0 %v84
  %v228 = vpop.f32.mrb[0].mxu0
  %v229 = vadd.f32 %v68, %v228
  %v230 = vpop.f32.mrb[0].mxu0
  %v231 = vpop.f32.mrb[0].mxu0
  %v232 = vadd.f32 %v68, %v231
  %v233 = vpop.f32.mrb[0].mxu0
  %234 = vdwg.mxu0
  %v235 = vpack.c.bf16 %v224, %v221
  %v236 = vpack.c.bf16 %v232, %v229
  %v237 = vld [vmem:[%s3] sm:$0xff]
  %v238 = vld [vmem:[%s3 + $0x8] sm:$0xff]
  %v239 = vld [vmem:[%s3 + $0x10] sm:$0xff]
  %v240 = vld [vmem:[%s3 + $0x18] sm:$0xff]
  %v241 = vld [vmem:[%s3 + $0x20] sm:$0xff]
  %v242 = vld [vmem:[%s3 + $0x28] sm:$0xff]
  %v243 = vld [vmem:[%s3 + $0x30] sm:$0xff]
  %v244 = vld [vmem:[%s3 + $0x38] sm:$0xff]
  %v245 = vld [vmem:[%s3 + $0x40] sm:$0xff]
  %v246 = vld [vmem:[%s3 + $0x48] sm:$0xff]
  %v247 = vld [vmem:[%s3 + $0x50] sm:$0xff]
  %v248 = vld [vmem:[%s3 + $0x58] sm:$0xff]
  %v249 = vld [vmem:[%s3 + $0x60] sm:$0xff]
  %v250 = vld [vmem:[%s3 + $0x68] sm:$0xff]
  %v251 = vld [vmem:[%s3 + $0x70] sm:$0xff]
  %v252 = vld [vmem:[%s3 + $0x78] sm:$0xff]
  %v253 = vld [vmem:[%s4] sm:$0x3]
  %v255 = vlaneseq
  %v256 = vshrl.u32 %v255, 7
  %v257 = vsub.s32 0, %v256
  %v258 = vrot.slane %v253, %v257
  %v259 = vlaneseq
  %v260 = vshrl.u32 %v259, 7
  %v261 = vsub.s32 1, %v260
  %v262 = vrot.slane %v253, %v261
  %v281 = vunpack.c.l.b16 %v237
  %v282 = vunpack.c.h.b16 %v237
  %v283 = vunpack.c.l.b16 %v238
  %v284 = vunpack.c.h.b16 %v238
  %v285 = vunpack.c.l.b16 %v239
  %v286 = vunpack.c.h.b16 %v239
  %v287 = vunpack.c.l.b16 %v240
  %v288 = vunpack.c.h.b16 %v240
  %v289 = vunpack.c.l.b16 %v241
  %v290 = vunpack.c.h.b16 %v241
  %v291 = vunpack.c.l.b16 %v242
  %v292 = vunpack.c.h.b16 %v242
  %v293 = vunpack.c.l.b16 %v243
  %v294 = vunpack.c.h.b16 %v243
  %v295 = vunpack.c.l.b16 %v244
  %v296 = vunpack.c.h.b16 %v244
  %v297 = vunpack.c.l.b16 %v245
  %v298 = vunpack.c.h.b16 %v245
  %v299 = vunpack.c.l.b16 %v246
  %v300 = vunpack.c.h.b16 %v246
  %v301 = vunpack.c.l.b16 %v247
  %v302 = vunpack.c.h.b16 %v247
  %v303 = vunpack.c.l.b16 %v248
  %v304 = vunpack.c.h.b16 %v248
  %v305 = vunpack.c.l.b16 %v249
  %v306 = vunpack.c.h.b16 %v249
  %v307 = vunpack.c.l.b16 %v250
  %v308 = vunpack.c.h.b16 %v250
  %v309 = vunpack.c.l.b16 %v251
  %v310 = vunpack.c.h.b16 %v251
  %v311 = vunpack.c.l.b16 %v252
  %v312 = vunpack.c.h.b16 %v252
  %v313 = vpack.c.b16 %v283, %v281
  %v314 = vpack.c.b16 %v284, %v282
  %v315 = vpack.c.b16 %v287, %v285
  %v316 = vpack.c.b16 %v288, %v286
  %v317 = vpack.c.b16 %v291, %v289
  %v318 = vpack.c.b16 %v292, %v290
  %v319 = vpack.c.b16 %v295, %v293
  %v320 = vpack.c.b16 %v296, %v294
  %v321 = vpack.c.b16 %v299, %v297
  %v322 = vpack.c.b16 %v300, %v298
  %v323 = vpack.c.b16 %v303, %v301
  %v324 = vpack.c.b16 %v304, %v302
  %v325 = vpack.c.b16 %v307, %v305
  %v326 = vpack.c.b16 %v308, %v306
  %v327 = vpack.c.b16 %v311, %v309
  %v328 = vpack.c.b16 %v312, %v310
  %345 = vmatprep.subr.bf16.mxu0 %v314
  %346 = vmatpush1.bf16.msra.mxu0 %v313
  %347 = vmatprep.subr.bf16.mxu0 %v316
  %348 = vmatpush1.bf16.msra.mxu0 %v315
  %349 = vmatprep.subr.bf16.mxu0 %v318
  %350 = vmatpush1.bf16.msra.mxu0 %v317
  %351 = vmatprep.subr.bf16.mxu0 %v320
  %352 = vmatpush1.bf16.msra.mxu0 %v319
  %353 = vmatprep.subr.bf16.mxu0 %v322
  %354 = vmatpush1.bf16.msra.mxu0 %v321
  %355 = vmatprep.subr.bf16.mxu0 %v324
  %356 = vmatpush1.bf16.msra.mxu0 %v323
  %357 = vmatprep.subr.bf16.mxu0 %v326
  %358 = vmatpush1.bf16.msra.mxu0 %v325
  %359 = vmatprep.subr.bf16.mxu0 %v328
  %360 = vmatpush1.bf16.msra.mxu0 %v327
  %361 = vmatprep.subr.bf16.mxu0 0
  %362 = vmatpush1.bf16.msra.mxu0 0
  %363 = vmatprep.subr.bf16.mxu0 0
  %364 = vmatpush1.bf16.msra.mxu0 0
  %365 = vmatprep.subr.bf16.mxu0 0
  %366 = vmatpush1.bf16.msra.mxu0 0
  %367 = vmatprep.subr.bf16.mxu0 0
  %368 = vmatpush1.bf16.msra.mxu0 0
  %369 = vmatprep.subr.bf16.mxu0 0
  %370 = vmatpush1.bf16.msra.mxu0 0
  %371 = vmatprep.subr.bf16.mxu0 0
  %372 = vmatpush1.bf16.msra.mxu0 0
  %373 = vmatprep.subr.bf16.mxu0 0
  %374 = vmatpush1.bf16.msra.mxu0 0
  %375 = vmatprep.subr.bf16.mxu0 0
  %376 = vmatpush1.bf16.msra.mxu0 0
  %377 = vmatprep.mubr.bf16.mxu0 0
  %378 = vmatmul.mubr.bf16.gmra.mrb[0].mxu0 %v235
  %v379 = vpop.f32.mrb[0].mxu0
  %v380 = vadd.f32 %v258, %v379
  %v381 = vpop.f32.mrb[0].mxu0
  %v382 = vadd.f32 %v262, %v381
  %v383 = vpop.f32.mrb[0].mxu0
  %v384 = vadd.f32 %v258, %v383
  %v385 = vpop.f32.mrb[0].mxu0
  %v386 = vadd.f32 %v262, %v385
  %387 = vmatprep.mubr.bf16.mxu0 0
  %388 = vmatmul.mubr.bf16.gmra.mrb[0].mxu0 %v236
  %v389 = vpop.f32.mrb[0].mxu0
  %v390 = vadd.f32 %v258, %v389
  %v391 = vpop.f32.mrb[0].mxu0
  %v392 = vadd.f32 %v262, %v391
  %v393 = vpop.f32.mrb[0].mxu0
  %v394 = vadd.f32 %v258, %v393
  %v395 = vpop.f32.mrb[0].mxu0
  %v396 = vadd.f32 %v262, %v395
  %397 = vdwg.mxu0
  %v398 = vmax.f32 %v380, 0.0
  %v399 = vmax.f32 %v382, 0.0
  %v400 = vmax.f32 %v384, 0.0
  %v401 = vmax.f32 %v386, 0.0
  %v402 = vmax.f32 %v390, 0.0
  %v403 = vmax.f32 %v392, 0.0
  %v404 = vmax.f32 %v394, 0.0
  %v405 = vmax.f32 %v396, 0.0
  %v406 = vpack.c.bf16 %v400, %v398
  %v407 = vpack.c.bf16 %v401, %v399
  %v408 = vpack.c.bf16 %v404, %v402
  %v409 = vpack.c.bf16 %v405, %v403
  %v410 = vld [vmem:[%s5] sm:$0xf]
  %v411 = vld [vmem:[%s5 + $0x4] sm:$0xf]
  %v412 = vld [vmem:[%s5 + $0x8] sm:$0xf]
  %v413 = vld [vmem:[%s5 + $0xc] sm:$0xf]
  %v414 = vld [vmem:[%s5 + $0x10] sm:$0xf]
  %v415 = vld [vmem:[%s5 + $0x14] sm:$0xf]
  %v416 = vld [vmem:[%s5 + $0x18] sm:$0xf]
  %v417 = vld [vmem:[%s5 + $0x1c] sm:$0xf]
  %v418 = vld [vmem:[%s5 + $0x20] sm:$0xf]
  %v419 = vld [vmem:[%s5 + $0x24] sm:$0xf]
  %v420 = vld [vmem:[%s5 + $0x28] sm:$0xf]
  %v421 = vld [vmem:[%s5 + $0x2c] sm:$0xf]
  %v422 = vld [vmem:[%s5 + $0x30] sm:$0xf]
  %v423 = vld [vmem:[%s5 + $0x34] sm:$0xf]
  %v424 = vld [vmem:[%s5 + $0x38] sm:$0xf]
  %v425 = vld [vmem:[%s5 + $0x3c] sm:$0xf]
  %v426 = vld [vmem:[%s5 + $0x40] sm:$0xf]
  %v427 = vld [vmem:[%s5 + $0x44] sm:$0xf]
  %v428 = vld [vmem:[%s5 + $0x48] sm:$0xf]
  %v429 = vld [vmem:[%s5 + $0x4c] sm:$0xf]
  %v430 = vld [vmem:[%s5 + $0x50] sm:$0xf]
  %v431 = vld [vmem:[%s5 + $0x54] sm:$0xf]
  %v432 = vld [vmem:[%s5 + $0x58] sm:$0xf]
  %v433 = vld [vmem:[%s5 + $0x5c] sm:$0xf]
  %v434 = vld [vmem:[%s5 + $0x60] sm:$0xf]
  %v435 = vld [vmem:[%s5 + $0x64] sm:$0xf]
  %v436 = vld [vmem:[%s5 + $0x68] sm:$0xf]
  %v437 = vld [vmem:[%s5 + $0x6c] sm:$0xf]
  %v438 = vld [vmem:[%s5 + $0x70] sm:$0xf]
  %v439 = vld [vmem:[%s5 + $0x74] sm:$0xf]
  %v440 = vld [vmem:[%s5 + $0x78] sm:$0xf]
  %v441 = vld [vmem:[%s5 + $0x7c] sm:$0xf]
  %v474 = vunpack.c.l.b16 %v410
  %v475 = vunpack.c.l.b16 %v411
  %v476 = vunpack.c.l.b16 %v412
  %v477 = vunpack.c.l.b16 %v413
  %v478 = vunpack.c.l.b16 %v414
  %v479 = vunpack.c.l.b16 %v415
  %v480 = vunpack.c.l.b16 %v416
  %v481 = vunpack.c.l.b16 %v417
  %v482 = vunpack.c.l.b16 %v418
  %v483 = vunpack.c.l.b16 %v419
  %v484 = vunpack.c.l.b16 %v420
  %v485 = vunpack.c.l.b16 %v421
  %v486 = vunpack.c.l.b16 %v422
  %v487 = vunpack.c.l.b16 %v423
  %v488 = vunpack.c.l.b16 %v424
  %v489 = vunpack.c.l.b16 %v425
  %v490 = vunpack.c.l.b16 %v426
  %v491 = vunpack.c.l.b16 %v427
  %v492 = vunpack.c.l.b16 %v428
  %v493 = vunpack.c.l.b16 %v429
  %v494 = vunpack.c.l.b16 %v430
  %v495 = vunpack.c.l.b16 %v431
  %v496 = vunpack.c.l.b16 %v432
  %v497 = vunpack.c.l.b16 %v433
  %v498 = vunpack.c.l.b16 %v434
  %v499 = vunpack.c.l.b16 %v435
  %v500 = vunpack.c.l.b16 %v436
  %v501 = vunpack.c.l.b16 %v437
  %v502 = vunpack.c.l.b16 %v438
  %v503 = vunpack.c.l.b16 %v439
  %v504 = vunpack.c.l.b16 %v440
  %v505 = vunpack.c.l.b16 %v441
  %v506 = vpack.c.b16 %v475, %v474
  %v507 = vpack.c.b16 %v477, %v476
  %v508 = vpack.c.b16 %v479, %v478
  %v509 = vpack.c.b16 %v481, %v480
  %v510 = vpack.c.b16 %v483, %v482
  %v511 = vpack.c.b16 %v485, %v484
  %v512 = vpack.c.b16 %v487, %v486
  %v513 = vpack.c.b16 %v489, %v488
  %v514 = vpack.c.b16 %v491, %v490
  %v515 = vpack.c.b16 %v493, %v492
  %v516 = vpack.c.b16 %v495, %v494
  %v517 = vpack.c.b16 %v497, %v496
  %v518 = vpack.c.b16 %v499, %v498
  %v519 = vpack.c.b16 %v501, %v500
  %v520 = vpack.c.b16 %v503, %v502
  %v521 = vpack.c.b16 %v505, %v504
  %538 = vmatprep.subr.bf16.mxu0 0
  %539 = vmatpush1.bf16.msra.mxu0 %v506
  %540 = vmatprep.subr.bf16.mxu0 0
  %541 = vmatpush1.bf16.msra.mxu0 %v507
  %542 = vmatprep.subr.bf16.mxu0 0
  %543 = vmatpush1.bf16.msra.mxu0 %v508
  %544 = vmatprep.subr.bf16.mxu0 0
  %545 = vmatpush1.bf16.msra.mxu0 %v509
  %546 = vmatprep.subr.bf16.mxu0 0
  %547 = vmatpush1.bf16.msra.mxu0 %v510
  %548 = vmatprep.subr.bf16.mxu0 0
  %549 = vmatpush1.bf16.msra.mxu0 %v511
  %550 = vmatprep.subr.bf16.mxu0 0
  %551 = vmatpush1.bf16.msra.mxu0 %v512
  %552 = vmatprep.subr.bf16.mxu0 0
  %553 = vmatpush1.bf16.msra.mxu0 %v513
  %554 = vmatprep.subr.bf16.mxu0 0
  %555 = vmatpush1.bf16.msra.mxu0 %v514
  %556 = vmatprep.subr.bf16.mxu0 0
  %557 = vmatpush1.bf16.msra.mxu0 %v515
  %558 = vmatprep.subr.bf16.mxu0 0
  %559 = vmatpush1.bf16.msra.mxu0 %v516
  %560 = vmatprep.subr.bf16.mxu0 0
  %561 = vmatpush1.bf16.msra.mxu0 %v517
  %562 = vmatprep.subr.bf16.mxu0 0
  %563 = vmatpush1.bf16.msra.mxu0 %v518
  %564 = vmatprep.subr.bf16.mxu0 0
  %565 = vmatpush1.bf16.msra.mxu0 %v519
  %566 = vmatprep.subr.bf16.mxu0 0
  %567 = vmatpush1.bf16.msra.mxu0 %v520
  %568 = vmatprep.subr.bf16.mxu0 0
  %569 = vmatpush1.bf16.msra.mxu0 %v521
  %570 = vmatprep.mubr.bf16.mxu0 %v407
  %571 = vmatmul.mubr.bf16.gmra.mrb[0].mxu0 %v406
  %v572 = vpop.f32.mrb[0].mxu0
  %v573 = vadd.f32 0.0, %v572
  %v574 = vpop.f32.mrb[0].mxu0
  %v575 = vpop.f32.mrb[0].mxu0
  %v576 = vadd.f32 0.0, %v575
  %v577 = vpop.f32.mrb[0].mxu0
  %578 = vmatprep.mubr.bf16.mxu0 %v409
  %579 = vmatmul.mubr.bf16.gmra.mrb[0].mxu0 %v408
  %v580 = vpop.f32.mrb[0].mxu0
  %v581 = vadd.f32 0.0, %v580
  %v582 = vpop.f32.mrb[0].mxu0
  %v583 = vpop.f32.mrb[0].mxu0
  %v584 = vadd.f32 0.0, %v583
  %v585 = vpop.f32.mrb[0].mxu0
  %586 = vdwg.mxu0
  %v587 = vadd.f32 %v221, %v573
  %v588 = vadd.f32 %v224, %v576
  %v589 = vadd.f32 %v229, %v581
  %v590 = vadd.f32 %v232, %v584
  %v591 = vld [vmem:[%s6] sm:$0x1]
  %v593 = vlaneseq
  %v594 = vshrl.u32 %v593, 7
  %v595 = vsub.s32 0, %v594
  %v596 = vrot.slane %v591, %v595
  %v598 = vadd.f32 %v587, %v596
  %v599 = vadd.f32 %v588, %v596
  %v600 = vadd.f32 %v589, %v596
  %v601 = vadd.f32 %v590, %v596
  %v602 = vpack.c.bf16 %v599, %v598
  %v603 = vpack.c.bf16 %v601, %v600
  %v606 = vunpack.c.l.b16 %v602
  %v607 = vunpack.c.h.b16 %v602
  %v608 = vunpack.c.l.b16 %v603
  %v609 = vunpack.c.h.b16 %v603
  %v610 = vpack.c.b16 %v606, %v606
  %v611 = vpack.c.b16 %v607, %v607
  %v612 = vpack.c.b16 %v608, %v608
  %v613 = vpack.c.b16 %v609, %v609
  %618 = vst [vmem:[%s7] sm:$0xf] %v610
  %619 = vst [vmem:[%s7 + $0x4] sm:$0xf] %v611
  %620 = vst [vmem:[%s7 + $0x8] sm:$0xf] %v612
  %621 = vst [vmem:[%s7 + $0xc] sm:$0xf] %v613
  // Predicated region
  $region30: #{timm_model_forward.5} parent=0 // pred_check
    _
  $region31: #{timm_model_forward.5} parent=0 // pred_check_branch
    %623 = sbr.rel (0) target = $region33
  $region32: #{timm_model_forward.5} parent=0 // pred_region
    _
  $region33: #{timm_model_forward.5} parent=0 // pred_fallthru
    _
  // Predicated region
  $region34: #{timm_model_forward.5} parent=0 // pred_check
    _
  $region35: #{timm_model_forward.5} parent=0 // pred_check_branch
    %625 = sbr.rel (0) target = $region37
  $region36: #{timm_model_forward.5} parent=0 // pred_region
    _
  $region37: #{timm_model_forward.5} parent=0 // pred_fallthru
    _

// kernel: timm_model_forward.6
$region0: #{timm_model_forward.6}
  #allocation0 [shape = 'u32[]', space=smem, size = 0x4, offset = 0x4, fixed_abs, tag = 'smem constant byte address 0x4 - core index']
  #allocation1 [shape = 'u32[144,128]{1,0:T(1,128)}', space=vmem, size = 0x12000, scoped, tag = 'internal scratch']
  %s0 = inlined_call_operand.vmem [shape: bf16[16,256], index: 0, kind: input, shape index: {}]
  %s1 = inlined_call_operand.vmem [shape: bf16[256,128], index: 1, kind: input, shape index: {}]
  %s2 = inlined_call_operand.vmem [shape: f32[1,128], index: 2, kind: input, shape index: {}]
  %s3 = inlined_call_operand.vmem [shape: bf16[128,256], index: 3, kind: input, shape index: {}]
  %s4 = inlined_call_operand.vmem [shape: f32[1,256], index: 4, kind: input, shape index: {}]
  %s5 = inlined_call_operand.vmem [shape: bf16[256,128], index: 5, kind: input, shape index: {}]
  %s6 = inlined_call_operand.vmem [shape: f32[1,128], index: 6, kind: input, shape index: {}]
  %s7 = inlined_call_operand.vmem [shape: bf16[16,128], index: 7, kind: output, shape index: {}]
  %s8 = sld [smem:[#allocation0]]
  $region38: #{timm_model_forward.6} parent=0
    _
  %s10 = ssub.s32 1, %s8
  %s11 = scalar_select 0, %s10, %s8
  // Predicated region
  $region2: #{timm_model_forward.6} parent=0 // pred_check
    _
  $region3: #{timm_model_forward.6} parent=0 // pred_check_branch
    %13 = sbr.rel (0) target = $region5
  $region4: #{timm_model_forward.6} parent=0 // pred_region
    _
  $region5: #{timm_model_forward.6} parent=0 // pred_fallthru
    _
  // Predicated region
  $region6: #{timm_model_forward.6} parent=0 // pred_check
    _
  $region7: #{timm_model_forward.6} parent=0 // pred_check_branch
    %15 = sbr.rel (0) target = $region9
  $region8: #{timm_model_forward.6} parent=0 // pred_region
    _
  $region9: #{timm_model_forward.6} parent=0 // pred_fallthru
    _
  // Predicated region
  $region10: #{timm_model_forward.6} parent=0 // pred_check
    _
  $region11: #{timm_model_forward.6} parent=0 // pred_check_branch
    %17 = sbr.rel (0) target = $region13
  $region12: #{timm_model_forward.6} parent=0 // pred_region
    _
  $region13: #{timm_model_forward.6} parent=0 // pred_fallthru
    _
  // Predicated region
  $region14: #{timm_model_forward.6} parent=0 // pred_check
    _
  $region15: #{timm_model_forward.6} parent=0 // pred_check_branch
    %19 = sbr.rel (0) target = $region17
  $region16: #{timm_model_forward.6} parent=0 // pred_region
    _
  $region17: #{timm_model_forward.6} parent=0 // pred_fallthru
    _
  // Predicated region
  $region18: #{timm_model_forward.6} parent=0 // pred_check
    _
  $region19: #{timm_model_forward.6} parent=0 // pred_check_branch
    %21 = sbr.rel (0) target = $region21
  $region20: #{timm_model_forward.6} parent=0 // pred_region
    _
  $region21: #{timm_model_forward.6} parent=0 // pred_fallthru
    _
  // Predicated region
  $region22: #{timm_model_forward.6} parent=0 // pred_check
    _
  $region23: #{timm_model_forward.6} parent=0 // pred_check_branch
    %23 = sbr.rel (0) target = $region25
  $region24: #{timm_model_forward.6} parent=0 // pred_region
    _
  $region25: #{timm_model_forward.6} parent=0 // pred_fallthru
    _
  // Predicated region
  $region26: #{timm_model_forward.6} parent=0 // pred_check
    _
  $region27: #{timm_model_forward.6} parent=0 // pred_check_branch
    %25 = sbr.rel (0) target = $region29
  $region28: #{timm_model_forward.6} parent=0 // pred_region
    _
  $region29: #{timm_model_forward.6} parent=0 // pred_fallthru
    _
  %v27 = vld [vmem:[%s0] sm:$0xff]
  %v28 = vld [vmem:[%s0 + $0x8] sm:$0xff]
  %v29 = vld [vmem:[%s1] sm:$0xf]
  %v30 = vld [vmem:[%s1 + $0x4] sm:$0xf]
  %v31 = vld [vmem:[%s1 + $0x8] sm:$0xf]
  %v32 = vld [vmem:[%s1 + $0xc] sm:$0xf]
  %v33 = vld [vmem:[%s1 + $0x10] sm:$0xf]
  %v34 = vld [vmem:[%s1 + $0x14] sm:$0xf]
  %v35 = vld [vmem:[%s1 + $0x18] sm:$0xf]
  %v36 = vld [vmem:[%s1 + $0x1c] sm:$0xf]
  %v37 = vld [vmem:[%s1 + $0x20] sm:$0xf]
  %v38 = vld [vmem:[%s1 + $0x24] sm:$0xf]
  %v39 = vld [vmem:[%s1 + $0x28] sm:$0xf]
  %v40 = vld [vmem:[%s1 + $0x2c] sm:$0xf]
  %v41 = vld [vmem:[%s1 + $0x30] sm:$0xf]
  %v42 = vld [vmem:[%s1 + $0x34] sm:$0xf]
  %v43 = vld [vmem:[%s1 + $0x38] sm:$0xf]
  %v44 = vld [vmem:[%s1 + $0x3c] sm:$0xf]
  %v45 = vld [vmem:[%s1 + $0x40] sm:$0xf]
  %v46 = vld [vmem:[%s1 + $0x44] sm:$0xf]
  %v47 = vld [vmem:[%s1 + $0x48] sm:$0xf]
  %v48 = vld [vmem:[%s1 + $0x4c] sm:$0xf]
  %v49 = vld [vmem:[%s1 + $0x50] sm:$0xf]
  %v50 = vld [vmem:[%s1 + $0x54] sm:$0xf]
  %v51 = vld [vmem:[%s1 + $0x58] sm:$0xf]
  %v52 = vld [vmem:[%s1 + $0x5c] sm:$0xf]
  %v53 = vld [vmem:[%s1 + $0x60] sm:$0xf]
  %v54 = vld [vmem:[%s1 + $0x64] sm:$0xf]
  %v55 = vld [vmem:[%s1 + $0x68] sm:$0xf]
  %v56 = vld [vmem:[%s1 + $0x6c] sm:$0xf]
  %v57 = vld [vmem:[%s1 + $0x70] sm:$0xf]
  %v58 = vld [vmem:[%s1 + $0x74] sm:$0xf]
  %v59 = vld [vmem:[%s1 + $0x78] sm:$0xf]
  %v60 = vld [vmem:[%s1 + $0x7c] sm:$0xf]
  %v61 = vld [vmem:[%s2] sm:$0x1]
  %v63 = vlaneseq
  %v64 = vshrl.u32 %v63, 7
  %v65 = vsub.s32 0, %v64
  %v66 = vrot.slane %v61, %v65
  %v70 = vunpack.c.l.b16 %v27
  %v71 = vunpack.c.h.b16 %v27
  %v72 = vunpack.c.l.b16 %v28
  %v73 = vunpack.c.h.b16 %v28
  %v74 = vpack.c.b16 %v72, %v70
  %v75 = vpack.c.b16 %v73, %v71
  %v110 = vunpack.c.l.b16 %v29
  %v111 = vunpack.c.l.b16 %v30
  %v112 = vunpack.c.l.b16 %v31
  %v113 = vunpack.c.l.b16 %v32
  %v114 = vunpack.c.l.b16 %v33
  %v115 = vunpack.c.l.b16 %v34
  %v116 = vunpack.c.l.b16 %v35
  %v117 = vunpack.c.l.b16 %v36
  %v118 = vunpack.c.l.b16 %v37
  %v119 = vunpack.c.l.b16 %v38
  %v120 = vunpack.c.l.b16 %v39
  %v121 = vunpack.c.l.b16 %v40
  %v122 = vunpack.c.l.b16 %v41
  %v123 = vunpack.c.l.b16 %v42
  %v124 = vunpack.c.l.b16 %v43
  %v125 = vunpack.c.l.b16 %v44
  %v126 = vunpack.c.l.b16 %v45
  %v127 = vunpack.c.l.b16 %v46
  %v128 = vunpack.c.l.b16 %v47
  %v129 = vunpack.c.l.b16 %v48
  %v130 = vunpack.c.l.b16 %v49
  %v131 = vunpack.c.l.b16 %v50
  %v132 = vunpack.c.l.b16 %v51
  %v133 = vunpack.c.l.b16 %v52
  %v134 = vunpack.c.l.b16 %v53
  %v135 = vunpack.c.l.b16 %v54
  %v136 = vunpack.c.l.b16 %v55
  %v137 = vunpack.c.l.b16 %v56
  %v138 = vunpack.c.l.b16 %v57
  %v139 = vunpack.c.l.b16 %v58
  %v140 = vunpack.c.l.b16 %v59
  %v141 = vunpack.c.l.b16 %v60
  %v142 = vpack.c.b16 %v111, %v110
  %v143 = vpack.c.b16 %v113, %v112
  %v144 = vpack.c.b16 %v115, %v114
  %v145 = vpack.c.b16 %v117, %v116
  %v146 = vpack.c.b16 %v119, %v118
  %v147 = vpack.c.b16 %v121, %v120
  %v148 = vpack.c.b16 %v123, %v122
  %v149 = vpack.c.b16 %v125, %v124
  %v150 = vpack.c.b16 %v127, %v126
  %v151 = vpack.c.b16 %v129, %v128
  %v152 = vpack.c.b16 %v131, %v130
  %v153 = vpack.c.b16 %v133, %v132
  %v154 = vpack.c.b16 %v135, %v134
  %v155 = vpack.c.b16 %v137, %v136
  %v156 = vpack.c.b16 %v139, %v138
  %v157 = vpack.c.b16 %v141, %v140
  %174 = vmatprep.subr.bf16.mxu0 0
  %175 = vmatpush1.bf16.msra.mxu0 %v142
  %176 = vmatprep.subr.bf16.mxu0 0
  %177 = vmatpush1.bf16.msra.mxu0 %v143
  %178 = vmatprep.subr.bf16.mxu0 0
  %179 = vmatpush1.bf16.msra.mxu0 %v144
  %180 = vmatprep.subr.bf16.mxu0 0
  %181 = vmatpush1.bf16.msra.mxu0 %v145
  %182 = vmatprep.subr.bf16.mxu0 0
  %183 = vmatpush1.bf16.msra.mxu0 %v146
  %184 = vmatprep.subr.bf16.mxu0 0
  %185 = vmatpush1.bf16.msra.mxu0 %v147
  %186 = vmatprep.subr.bf16.mxu0 0
  %187 = vmatpush1.bf16.msra.mxu0 %v148
  %188 = vmatprep.subr.bf16.mxu0 0
  %189 = vmatpush1.bf16.msra.mxu0 %v149
  %190 = vmatprep.subr.bf16.mxu0 0
  %191 = vmatpush1.bf16.msra.mxu0 %v150
  %192 = vmatprep.subr.bf16.mxu0 0
  %193 = vmatpush1.bf16.msra.mxu0 %v151
  %194 = vmatprep.subr.bf16.mxu0 0
  %195 = vmatpush1.bf16.msra.mxu0 %v152
  %196 = vmatprep.subr.bf16.mxu0 0
  %197 = vmatpush1.bf16.msra.mxu0 %v153
  %198 = vmatprep.subr.bf16.mxu0 0
  %199 = vmatpush1.bf16.msra.mxu0 %v154
  %200 = vmatprep.subr.bf16.mxu0 0
  %201 = vmatpush1.bf16.msra.mxu0 %v155
  %202 = vmatprep.subr.bf16.mxu0 0
  %203 = vmatpush1.bf16.msra.mxu0 %v156
  %204 = vmatprep.subr.bf16.mxu0 0
  %205 = vmatpush1.bf16.msra.mxu0 %v157
  %206 = vmatprep.mubr.bf16.mxu0 %v75
  %207 = vmatmul.mubr.bf16.gmra.mrb[0].mxu0 %v74
  %v208 = vpop.f32.mrb[0].mxu0
  %v209 = vadd.f32 %v66, %v208
  %v210 = vpop.f32.mrb[0].mxu0
  %v211 = vpop.f32.mrb[0].mxu0
  %v212 = vadd.f32 %v66, %v211
  %v213 = vpop.f32.mrb[0].mxu0
  %214 = vdwg.mxu0
  %v215 = vpack.c.bf16 %v212, %v209
  %v216 = vld [vmem:[%s3] sm:$0xff]
  %v217 = vld [vmem:[%s3 + $0x8] sm:$0xff]
  %v218 = vld [vmem:[%s3 + $0x10] sm:$0xff]
  %v219 = vld [vmem:[%s3 + $0x18] sm:$0xff]
  %v220 = vld [vmem:[%s3 + $0x20] sm:$0xff]
  %v221 = vld [vmem:[%s3 + $0x28] sm:$0xff]
  %v222 = vld [vmem:[%s3 + $0x30] sm:$0xff]
  %v223 = vld [vmem:[%s3 + $0x38] sm:$0xff]
  %v224 = vld [vmem:[%s3 + $0x40] sm:$0xff]
  %v225 = vld [vmem:[%s3 + $0x48] sm:$0xff]
  %v226 = vld [vmem:[%s3 + $0x50] sm:$0xff]
  %v227 = vld [vmem:[%s3 + $0x58] sm:$0xff]
  %v228 = vld [vmem:[%s3 + $0x60] sm:$0xff]
  %v229 = vld [vmem:[%s3 + $0x68] sm:$0xff]
  %v230 = vld [vmem:[%s3 + $0x70] sm:$0xff]
  %v231 = vld [vmem:[%s3 + $0x78] sm:$0xff]
  %v232 = vld [vmem:[%s4] sm:$0x3]
  %v234 = vlaneseq
  %v235 = vshrl.u32 %v234, 7
  %v236 = vsub.s32 0, %v235
  %v237 = vrot.slane %v232, %v236
  %v238 = vlaneseq
  %v239 = vshrl.u32 %v238, 7
  %v240 = vsub.s32 1, %v239
  %v241 = vrot.slane %v232, %v240
  %v260 = vunpack.c.l.b16 %v216
  %v261 = vunpack.c.h.b16 %v216
  %v262 = vunpack.c.l.b16 %v217
  %v263 = vunpack.c.h.b16 %v217
  %v264 = vunpack.c.l.b16 %v218
  %v265 = vunpack.c.h.b16 %v218
  %v266 = vunpack.c.l.b16 %v219
  %v267 = vunpack.c.h.b16 %v219
  %v268 = vunpack.c.l.b16 %v220
  %v269 = vunpack.c.h.b16 %v220
  %v270 = vunpack.c.l.b16 %v221
  %v271 = vunpack.c.h.b16 %v221
  %v272 = vunpack.c.l.b16 %v222
  %v273 = vunpack.c.h.b16 %v222
  %v274 = vunpack.c.l.b16 %v223
  %v275 = vunpack.c.h.b16 %v223
  %v276 = vunpack.c.l.b16 %v224
  %v277 = vunpack.c.h.b16 %v224
  %v278 = vunpack.c.l.b16 %v225
  %v279 = vunpack.c.h.b16 %v225
  %v280 = vunpack.c.l.b16 %v226
  %v281 = vunpack.c.h.b16 %v226
  %v282 = vunpack.c.l.b16 %v227
  %v283 = vunpack.c.h.b16 %v227
  %v284 = vunpack.c.l.b16 %v228
  %v285 = vunpack.c.h.b16 %v228
  %v286 = vunpack.c.l.b16 %v229
  %v287 = vunpack.c.h.b16 %v229
  %v288 = vunpack.c.l.b16 %v230
  %v289 = vunpack.c.h.b16 %v230
  %v290 = vunpack.c.l.b16 %v231
  %v291 = vunpack.c.h.b16 %v231
  %v292 = vpack.c.b16 %v262, %v260
  %v293 = vpack.c.b16 %v263, %v261
  %v294 = vpack.c.b16 %v266, %v264
  %v295 = vpack.c.b16 %v267, %v265
  %v296 = vpack.c.b16 %v270, %v268
  %v297 = vpack.c.b16 %v271, %v269
  %v298 = vpack.c.b16 %v274, %v272
  %v299 = vpack.c.b16 %v275, %v273
  %v300 = vpack.c.b16 %v278, %v276
  %v301 = vpack.c.b16 %v279, %v277
  %v302 = vpack.c.b16 %v282, %v280
  %v303 = vpack.c.b16 %v283, %v281
  %v304 = vpack.c.b16 %v286, %v284
  %v305 = vpack.c.b16 %v287, %v285
  %v306 = vpack.c.b16 %v290, %v288
  %v307 = vpack.c.b16 %v291, %v289
  %324 = vmatprep.subr.bf16.mxu0 %v293
  %325 = vmatpush1.bf16.msra.mxu0 %v292
  %326 = vmatprep.subr.bf16.mxu0 %v295
  %327 = vmatpush1.bf16.msra.mxu0 %v294
  %328 = vmatprep.subr.bf16.mxu0 %v297
  %329 = vmatpush1.bf16.msra.mxu0 %v296
  %330 = vmatprep.subr.bf16.mxu0 %v299
  %331 = vmatpush1.bf16.msra.mxu0 %v298
  %332 = vmatprep.subr.bf16.mxu0 %v301
  %333 = vmatpush1.bf16.msra.mxu0 %v300
  %334 = vmatprep.subr.bf16.mxu0 %v303
  %335 = vmatpush1.bf16.msra.mxu0 %v302
  %336 = vmatprep.subr.bf16.mxu0 %v305
  %337 = vmatpush1.bf16.msra.mxu0 %v304
  %338 = vmatprep.subr.bf16.mxu0 %v307
  %339 = vmatpush1.bf16.msra.mxu0 %v306
  %340 = vmatprep.subr.bf16.mxu0 0
  %341 = vmatpush1.bf16.msra.mxu0 0
  %342 = vmatprep.subr.bf16.mxu0 0
  %343 = vmatpush1.bf16.msra.mxu0 0
  %344 = vmatprep.subr.bf16.mxu0 0
  %345 = vmatpush1.bf16.msra.mxu0 0
  %346 = vmatprep.subr.bf16.mxu0 0
  %347 = vmatpush1.bf16.msra.mxu0 0
  %348 = vmatprep.subr.bf16.mxu0 0
  %349 = vmatpush1.bf16.msra.mxu0 0
  %350 = vmatprep.subr.bf16.mxu0 0
  %351 = vmatpush1.bf16.msra.mxu0 0
  %352 = vmatprep.subr.bf16.mxu0 0
  %353 = vmatpush1.bf16.msra.mxu0 0
  %354 = vmatprep.subr.bf16.mxu0 0
  %355 = vmatpush1.bf16.msra.mxu0 0
  %356 = vmatprep.mubr.bf16.mxu0 0
  %357 = vmatmul.mubr.bf16.gmra.mrb[0].mxu0 %v215
  %v358 = vpop.f32.mrb[0].mxu0
  %v359 = vadd.f32 %v237, %v358
  %v360 = vpop.f32.mrb[0].mxu0
  %v361 = vadd.f32 %v241, %v360
  %v362 = vpop.f32.mrb[0].mxu0
  %v363 = vadd.f32 %v237, %v362
  %v364 = vpop.f32.mrb[0].mxu0
  %v365 = vadd.f32 %v241, %v364
  %366 = vdwg.mxu0
  %v367 = vmax.f32 %v359, 0.0
  %v368 = vmax.f32 %v361, 0.0
  %v369 = vmax.f32 %v363, 0.0
  %v370 = vmax.f32 %v365, 0.0
  %v371 = vpack.c.bf16 %v369, %v367
  %v372 = vpack.c.bf16 %v370, %v368
  %v373 = vld [vmem:[%s5] sm:$0xf]
  %v374 = vld [vmem:[%s5 + $0x4] sm:$0xf]
  %v375 = vld [vmem:[%s5 + $0x8] sm:$0xf]
  %v376 = vld [vmem:[%s5 + $0xc] sm:$0xf]
  %v377 = vld [vmem:[%s5 + $0x10] sm:$0xf]
  %v378 = vld [vmem:[%s5 + $0x14] sm:$0xf]
  %v379 = vld [vmem:[%s5 + $0x18] sm:$0xf]
  %v380 = vld [vmem:[%s5 + $0x1c] sm:$0xf]
  %v381 = vld [vmem:[%s5 + $0x20] sm:$0xf]
  %v382 = vld [vmem:[%s5 + $0x24] sm:$0xf]
  %v383 = vld [vmem:[%s5 + $0x28] sm:$0xf]
  %v384 = vld [vmem:[%s5 + $0x2c] sm:$0xf]
  %v385 = vld [vmem:[%s5 + $0x30] sm:$0xf]
  %v386 = vld [vmem:[%s5 + $0x34] sm:$0xf]
  %v387 = vld [vmem:[%s5 + $0x38] sm:$0xf]
  %v388 = vld [vmem:[%s5 + $0x3c] sm:$0xf]
  %v389 = vld [vmem:[%s5 + $0x40] sm:$0xf]
  %v390 = vld [vmem:[%s5 + $0x44] sm:$0xf]
  %v391 = vld [vmem:[%s5 + $0x48] sm:$0xf]
  %v392 = vld [vmem:[%s5 + $0x4c] sm:$0xf]
  %v393 = vld [vmem:[%s5 + $0x50] sm:$0xf]
  %v394 = vld [vmem:[%s5 + $0x54] sm:$0xf]
  %v395 = vld [vmem:[%s5 + $0x58] sm:$0xf]
  %v396 = vld [vmem:[%s5 + $0x5c] sm:$0xf]
  %v397 = vld [vmem:[%s5 + $0x60] sm:$0xf]
  %v398 = vld [vmem:[%s5 + $0x64] sm:$0xf]
  %v399 = vld [vmem:[%s5 + $0x68] sm:$0xf]
  %v400 = vld [vmem:[%s5 + $0x6c] sm:$0xf]
  %v401 = vld [vmem:[%s5 + $0x70] sm:$0xf]
  %v402 = vld [vmem:[%s5 + $0x74] sm:$0xf]
  %v403 = vld [vmem:[%s5 + $0x78] sm:$0xf]
  %v404 = vld [vmem:[%s5 + $0x7c] sm:$0xf]
  %v437 = vunpack.c.l.b16 %v373
  %v438 = vunpack.c.l.b16 %v374
  %v439 = vunpack.c.l.b16 %v375
  %v440 = vunpack.c.l.b16 %v376
  %v441 = vunpack.c.l.b16 %v377
  %v442 = vunpack.c.l.b16 %v378
  %v443 = vunpack.c.l.b16 %v379
  %v444 = vunpack.c.l.b16 %v380
  %v445 = vunpack.c.l.b16 %v381
  %v446 = vunpack.c.l.b16 %v382
  %v447 = vunpack.c.l.b16 %v383
  %v448 = vunpack.c.l.b16 %v384
  %v449 = vunpack.c.l.b16 %v385
  %v450 = vunpack.c.l.b16 %v386
  %v451 = vunpack.c.l.b16 %v387
  %v452 = vunpack.c.l.b16 %v388
  %v453 = vunpack.c.l.b16 %v389
  %v454 = vunpack.c.l.b16 %v390
  %v455 = vunpack.c.l.b16 %v391
  %v456 = vunpack.c.l.b16 %v392
  %v457 = vunpack.c.l.b16 %v393
  %v458 = vunpack.c.l.b16 %v394
  %v459 = vunpack.c.l.b16 %v395
  %v460 = vunpack.c.l.b16 %v396
  %v461 = vunpack.c.l.b16 %v397
  %v462 = vunpack.c.l.b16 %v398
  %v463 = vunpack.c.l.b16 %v399
  %v464 = vunpack.c.l.b16 %v400
  %v465 = vunpack.c.l.b16 %v401
  %v466 = vunpack.c.l.b16 %v402
  %v467 = vunpack.c.l.b16 %v403
  %v468 = vunpack.c.l.b16 %v404
  %v469 = vpack.c.b16 %v438, %v437
  %v470 = vpack.c.b16 %v440, %v439
  %v471 = vpack.c.b16 %v442, %v441
  %v472 = vpack.c.b16 %v444, %v443
  %v473 = vpack.c.b16 %v446, %v445
  %v474 = vpack.c.b16 %v448, %v447
  %v475 = vpack.c.b16 %v450, %v449
  %v476 = vpack.c.b16 %v452, %v451
  %v477 = vpack.c.b16 %v454, %v453
  %v478 = vpack.c.b16 %v456, %v455
  %v479 = vpack.c.b16 %v458, %v457
  %v480 = vpack.c.b16 %v460, %v459
  %v481 = vpack.c.b16 %v462, %v461
  %v482 = vpack.c.b16 %v464, %v463
  %v483 = vpack.c.b16 %v466, %v465
  %v484 = vpack.c.b16 %v468, %v467
  %501 = vmatprep.subr.bf16.mxu0 0
  %502 = vmatpush1.bf16.msra.mxu0 %v469
  %503 = vmatprep.subr.bf16.mxu0 0
  %504 = vmatpush1.bf16.msra.mxu0 %v470
  %505 = vmatprep.subr.bf16.mxu0 0
  %506 = vmatpush1.bf16.msra.mxu0 %v471
  %507 = vmatprep.subr.bf16.mxu0 0
  %508 = vmatpush1.bf16.msra.mxu0 %v472
  %509 = vmatprep.subr.bf16.mxu0 0
  %510 = vmatpush1.bf16.msra.mxu0 %v473
  %511 = vmatprep.subr.bf16.mxu0 0
  %512 = vmatpush1.bf16.msra.mxu0 %v474
  %513 = vmatprep.subr.bf16.mxu0 0
  %514 = vmatpush1.bf16.msra.mxu0 %v475
  %515 = vmatprep.subr.bf16.mxu0 0
  %516 = vmatpush1.bf16.msra.mxu0 %v476
  %517 = vmatprep.subr.bf16.mxu0 0
  %518 = vmatpush1.bf16.msra.mxu0 %v477
  %519 = vmatprep.subr.bf16.mxu0 0
  %520 = vmatpush1.bf16.msra.mxu0 %v478
  %521 = vmatprep.subr.bf16.mxu0 0
  %522 = vmatpush1.bf16.msra.mxu0 %v479
  %523 = vmatprep.subr.bf16.mxu0 0
  %524 = vmatpush1.bf16.msra.mxu0 %v480
  %525 = vmatprep.subr.bf16.mxu0 0
  %526 = vmatpush1.bf16.msra.mxu0 %v481
  %527 = vmatprep.subr.bf16.mxu0 0
  %528 = vmatpush1.bf16.msra.mxu0 %v482
  %529 = vmatprep.subr.bf16.mxu0 0
  %530 = vmatpush1.bf16.msra.mxu0 %v483
  %531 = vmatprep.subr.bf16.mxu0 0
  %532 = vmatpush1.bf16.msra.mxu0 %v484
  %533 = vmatprep.mubr.bf16.mxu0 %v372
  %534 = vmatmul.mubr.bf16.gmra.mrb[0].mxu0 %v371
  %v535 = vpop.f32.mrb[0].mxu0
  %v536 = vadd.f32 0.0, %v535
  %v537 = vpop.f32.mrb[0].mxu0
  %v538 = vpop.f32.mrb[0].mxu0
  %v539 = vadd.f32 0.0, %v538
  %v540 = vpop.f32.mrb[0].mxu0
  %541 = vdwg.mxu0
  %v542 = vadd.f32 %v209, %v536
  %v543 = vadd.f32 %v212, %v539
  %v544 = vld [vmem:[%s6] sm:$0x1]
  %v546 = vlaneseq
  %v547 = vshrl.u32 %v546, 7
  %v548 = vsub.s32 0, %v547
  %v549 = vrot.slane %v544, %v548
  %v551 = vadd.f32 %v542, %v549
  %v552 = vadd.f32 %v543, %v549
  %v553 = vpack.c.bf16 %v552, %v551
  %v555 = vunpack.c.l.b16 %v553
  %v556 = vunpack.c.h.b16 %v553
  %v557 = vpack.c.b16 %v555, %v555
  %v558 = vpack.c.b16 %v556, %v556
  %561 = vst [vmem:[%s7] sm:$0xf] %v557
  %562 = vst [vmem:[%s7 + $0x4] sm:$0xf] %v558
  // Predicated region
  $region30: #{timm_model_forward.6} parent=0 // pred_check
    _
  $region31: #{timm_model_forward.6} parent=0 // pred_check_branch
    %564 = sbr.rel (0) target = $region33
  $region32: #{timm_model_forward.6} parent=0 // pred_region
    _
  $region33: #{timm_model_forward.6} parent=0 // pred_fallthru
    _
  // Predicated region
  $region34: #{timm_model_forward.6} parent=0 // pred_check
    _
  $region35: #{timm_model_forward.6} parent=0 // pred_check_branch
    %566 = sbr.rel (0) target = $region37
  $region36: #{timm_model_forward.6} parent=0 // pred_region
    _
  $region37: #{timm_model_forward.6} parent=0 // pred_fallthru
    _

// kernel: timm_model_forward.7
$region0: #{timm_model_forward.7}
  #allocation0 [shape = 'u32[]', space=smem, size = 0x4, offset = 0x4, fixed_abs, tag = 'smem constant byte address 0x4 - core index']
  #allocation1 [shape = 'u32[144,128]{1,0:T(1,128)}', space=vmem, size = 0x12000, scoped, tag = 'internal scratch']
  %s0 = inlined_call_operand.vmem [shape: bf16[8,256], index: 0, kind: input, shape index: {}]
  %s1 = inlined_call_operand.vmem [shape: bf16[256,128], index: 1, kind: input, shape index: {}]
  %s2 = inlined_call_operand.vmem [shape: f32[1,128], index: 2, kind: input, shape index: {}]
  %s3 = inlined_call_operand.vmem [shape: bf16[128,256], index: 3, kind: input, shape index: {}]
  %s4 = inlined_call_operand.vmem [shape: f32[1,256], index: 4, kind: input, shape index: {}]
  %s5 = inlined_call_operand.vmem [shape: bf16[256,128], index: 5, kind: input, shape index: {}]
  %s6 = inlined_call_operand.vmem [shape: f32[1,128], index: 6, kind: input, shape index: {}]
  %s7 = inlined_call_operand.vmem [shape: bf16[8,128], index: 7, kind: output, shape index: {}]
  %s8 = sld [smem:[#allocation0]]
  $region38: #{timm_model_forward.7} parent=0
    _
  %s10 = ssub.s32 1, %s8
  %s11 = scalar_select 0, %s10, %s8
  // Predicated region
  $region2: #{timm_model_forward.7} parent=0 // pred_check
    _
  $region3: #{timm_model_forward.7} parent=0 // pred_check_branch
    %13 = sbr.rel (0) target = $region5
  $region4: #{timm_model_forward.7} parent=0 // pred_region
    _
  $region5: #{timm_model_forward.7} parent=0 // pred_fallthru
    _
  // Predicated region
  $region6: #{timm_model_forward.7} parent=0 // pred_check
    _
  $region7: #{timm_model_forward.7} parent=0 // pred_check_branch
    %15 = sbr.rel (0) target = $region9
  $region8: #{timm_model_forward.7} parent=0 // pred_region
    _
  $region9: #{timm_model_forward.7} parent=0 // pred_fallthru
    _
  // Predicated region
  $region10: #{timm_model_forward.7} parent=0 // pred_check
    _
  $region11: #{timm_model_forward.7} parent=0 // pred_check_branch
    %17 = sbr.rel (0) target = $region13
  $region12: #{timm_model_forward.7} parent=0 // pred_region
    _
  $region13: #{timm_model_forward.7} parent=0 // pred_fallthru
    _
  // Predicated region
  $region14: #{timm_model_forward.7} parent=0 // pred_check
    _
  $region15: #{timm_model_forward.7} parent=0 // pred_check_branch
    %19 = sbr.rel (0) target = $region17
  $region16: #{timm_model_forward.7} parent=0 // pred_region
    _
  $region17: #{timm_model_forward.7} parent=0 // pred_fallthru
    _
  // Predicated region
  $region18: #{timm_model_forward.7} parent=0 // pred_check
    _
  $region19: #{timm_model_forward.7} parent=0 // pred_check_branch
    %21 = sbr.rel (0) target = $region21
  $region20: #{timm_model_forward.7} parent=0 // pred_region
    _
  $region21: #{timm_model_forward.7} parent=0 // pred_fallthru
    _
  // Predicated region
  $region22: #{timm_model_forward.7} parent=0 // pred_check
    _
  $region23: #{timm_model_forward.7} parent=0 // pred_check_branch
    %23 = sbr.rel (0) target = $region25
  $region24: #{timm_model_forward.7} parent=0 // pred_region
    _
  $region25: #{timm_model_forward.7} parent=0 // pred_fallthru
    _
  // Predicated region
  $region26: #{timm_model_forward.7} parent=0 // pred_check
    _
  $region27: #{timm_model_forward.7} parent=0 // pred_check_branch
    %25 = sbr.rel (0) target = $region29
  $region28: #{timm_model_forward.7} parent=0 // pred_region
    _
  $region29: #{timm_model_forward.7} parent=0 // pred_fallthru
    _
  %v27 = vld [vmem:[%s0] sm:$0xff]
  %v28 = vld [vmem:[%s1] sm:$0xf]
  %v29 = vld [vmem:[%s1 + $0x4] sm:$0xf]
  %v30 = vld [vmem:[%s1 + $0x8] sm:$0xf]
  %v31 = vld [vmem:[%s1 + $0xc] sm:$0xf]
  %v32 = vld [vmem:[%s1 + $0x10] sm:$0xf]
  %v33 = vld [vmem:[%s1 + $0x14] sm:$0xf]
  %v34 = vld [vmem:[%s1 + $0x18] sm:$0xf]
  %v35 = vld [vmem:[%s1 + $0x1c] sm:$0xf]
  %v36 = vld [vmem:[%s1 + $0x20] sm:$0xf]
  %v37 = vld [vmem:[%s1 + $0x24] sm:$0xf]
  %v38 = vld [vmem:[%s1 + $0x28] sm:$0xf]
  %v39 = vld [vmem:[%s1 + $0x2c] sm:$0xf]
  %v40 = vld [vmem:[%s1 + $0x30] sm:$0xf]
  %v41 = vld [vmem:[%s1 + $0x34] sm:$0xf]
  %v42 = vld [vmem:[%s1 + $0x38] sm:$0xf]
  %v43 = vld [vmem:[%s1 + $0x3c] sm:$0xf]
  %v44 = vld [vmem:[%s1 + $0x40] sm:$0xf]
  %v45 = vld [vmem:[%s1 + $0x44] sm:$0xf]
  %v46 = vld [vmem:[%s1 + $0x48] sm:$0xf]
  %v47 = vld [vmem:[%s1 + $0x4c] sm:$0xf]
  %v48 = vld [vmem:[%s1 + $0x50] sm:$0xf]
  %v49 = vld [vmem:[%s1 + $0x54] sm:$0xf]
  %v50 = vld [vmem:[%s1 + $0x58] sm:$0xf]
  %v51 = vld [vmem:[%s1 + $0x5c] sm:$0xf]
  %v52 = vld [vmem:[%s1 + $0x60] sm:$0xf]
  %v53 = vld [vmem:[%s1 + $0x64] sm:$0xf]
  %v54 = vld [vmem:[%s1 + $0x68] sm:$0xf]
  %v55 = vld [vmem:[%s1 + $0x6c] sm:$0xf]
  %v56 = vld [vmem:[%s1 + $0x70] sm:$0xf]
  %v57 = vld [vmem:[%s1 + $0x74] sm:$0xf]
  %v58 = vld [vmem:[%s1 + $0x78] sm:$0xf]
  %v59 = vld [vmem:[%s1 + $0x7c] sm:$0xf]
  %v60 = vld [vmem:[%s2] sm:$0x1]
  %v62 = vlaneseq
  %v63 = vshrl.u32 %v62, 7
  %v64 = vsub.s32 0, %v63
  %v65 = vrot.slane %v60, %v64
  %v68 = vunpack.c.l.b16 %v27
  %v69 = vunpack.c.h.b16 %v27
  %v70 = vpack.c.b16 %v68, %v68
  %v71 = vpack.c.b16 %v69, %v69
  %v106 = vunpack.c.l.b16 %v28
  %v107 = vunpack.c.l.b16 %v29
  %v108 = vunpack.c.l.b16 %v30
  %v109 = vunpack.c.l.b16 %v31
  %v110 = vunpack.c.l.b16 %v32
  %v111 = vunpack.c.l.b16 %v33
  %v112 = vunpack.c.l.b16 %v34
  %v113 = vunpack.c.l.b16 %v35
  %v114 = vunpack.c.l.b16 %v36
  %v115 = vunpack.c.l.b16 %v37
  %v116 = vunpack.c.l.b16 %v38
  %v117 = vunpack.c.l.b16 %v39
  %v118 = vunpack.c.l.b16 %v40
  %v119 = vunpack.c.l.b16 %v41
  %v120 = vunpack.c.l.b16 %v42
  %v121 = vunpack.c.l.b16 %v43
  %v122 = vunpack.c.l.b16 %v44
  %v123 = vunpack.c.l.b16 %v45
  %v124 = vunpack.c.l.b16 %v46
  %v125 = vunpack.c.l.b16 %v47
  %v126 = vunpack.c.l.b16 %v48
  %v127 = vunpack.c.l.b16 %v49
  %v128 = vunpack.c.l.b16 %v50
  %v129 = vunpack.c.l.b16 %v51
  %v130 = vunpack.c.l.b16 %v52
  %v131 = vunpack.c.l.b16 %v53
  %v132 = vunpack.c.l.b16 %v54
  %v133 = vunpack.c.l.b16 %v55
  %v134 = vunpack.c.l.b16 %v56
  %v135 = vunpack.c.l.b16 %v57
  %v136 = vunpack.c.l.b16 %v58
  %v137 = vunpack.c.l.b16 %v59
  %v138 = vpack.c.b16 %v107, %v106
  %v139 = vpack.c.b16 %v109, %v108
  %v140 = vpack.c.b16 %v111, %v110
  %v141 = vpack.c.b16 %v113, %v112
  %v142 = vpack.c.b16 %v115, %v114
  %v143 = vpack.c.b16 %v117, %v116
  %v144 = vpack.c.b16 %v119, %v118
  %v145 = vpack.c.b16 %v121, %v120
  %v146 = vpack.c.b16 %v123, %v122
  %v147 = vpack.c.b16 %v125, %v124
  %v148 = vpack.c.b16 %v127, %v126
  %v149 = vpack.c.b16 %v129, %v128
  %v150 = vpack.c.b16 %v131, %v130
  %v151 = vpack.c.b16 %v133, %v132
  %v152 = vpack.c.b16 %v135, %v134
  %v153 = vpack.c.b16 %v137, %v136
  %170 = vmatprep.subr.bf16.mxu0 0
  %171 = vmatpush1.bf16.msra.mxu0 %v138
  %172 = vmatprep.subr.bf16.mxu0 0
  %173 = vmatpush1.bf16.msra.mxu0 %v139
  %174 = vmatprep.subr.bf16.mxu0 0
  %175 = vmatpush1.bf16.msra.mxu0 %v140
  %176 = vmatprep.subr.bf16.mxu0 0
  %177 = vmatpush1.bf16.msra.mxu0 %v141
  %178 = vmatprep.subr.bf16.mxu0 0
  %179 = vmatpush1.bf16.msra.mxu0 %v142
  %180 = vmatprep.subr.bf16.mxu0 0
  %181 = vmatpush1.bf16.msra.mxu0 %v143
  %182 = vmatprep.subr.bf16.mxu0 0
  %183 = vmatpush1.bf16.msra.mxu0 %v144
  %184 = vmatprep.subr.bf16.mxu0 0
  %185 = vmatpush1.bf16.msra.mxu0 %v145
  %186 = vmatprep.subr.bf16.mxu0 0
  %187 = vmatpush1.bf16.msra.mxu0 %v146
  %188 = vmatprep.subr.bf16.mxu0 0
  %189 = vmatpush1.bf16.msra.mxu0 %v147
  %190 = vmatprep.subr.bf16.mxu0 0
  %191 = vmatpush1.bf16.msra.mxu0 %v148
  %192 = vmatprep.subr.bf16.mxu0 0
  %193 = vmatpush1.bf16.msra.mxu0 %v149
  %194 = vmatprep.subr.bf16.mxu0 0
  %195 = vmatpush1.bf16.msra.mxu0 %v150
  %196 = vmatprep.subr.bf16.mxu0 0
  %197 = vmatpush1.bf16.msra.mxu0 %v151
  %198 = vmatprep.subr.bf16.mxu0 0
  %199 = vmatpush1.bf16.msra.mxu0 %v152
  %200 = vmatprep.subr.bf16.mxu0 0
  %201 = vmatpush1.bf16.msra.mxu0 %v153
  %202 = vmatprep.mubr.bf16.mxu0 %v71
  %203 = vmatmul.mubr.bf16.gmra.mrb[0].mxu0 %v70
  %v204 = vpop.f32.mrb[0].mxu0
  %v205 = vadd.f32 %v65, %v204
  %v206 = vpop.f32.mrb[0].mxu0
  %v207 = vpop.f32.mrb[0].mxu0
  %v208 = vpop.f32.mrb[0].mxu0
  %209 = vdwg.mxu0
  %v210 = vpack.c.bf16 %v205, %v205
  %v211 = vld [vmem:[%s3] sm:$0xff]
  %v212 = vld [vmem:[%s3 + $0x8] sm:$0xff]
  %v213 = vld [vmem:[%s3 + $0x10] sm:$0xff]
  %v214 = vld [vmem:[%s3 + $0x18] sm:$0xff]
  %v215 = vld [vmem:[%s3 + $0x20] sm:$0xff]
  %v216 = vld [vmem:[%s3 + $0x28] sm:$0xff]
  %v217 = vld [vmem:[%s3 + $0x30] sm:$0xff]
  %v218 = vld [vmem:[%s3 + $0x38] sm:$0xff]
  %v219 = vld [vmem:[%s3 + $0x40] sm:$0xff]
  %v220 = vld [vmem:[%s3 + $0x48] sm:$0xff]
  %v221 = vld [vmem:[%s3 + $0x50] sm:$0xff]
  %v222 = vld [vmem:[%s3 + $0x58] sm:$0xff]
  %v223 = vld [vmem:[%s3 + $0x60] sm:$0xff]
  %v224 = vld [vmem:[%s3 + $0x68] sm:$0xff]
  %v225 = vld [vmem:[%s3 + $0x70] sm:$0xff]
  %v226 = vld [vmem:[%s3 + $0x78] sm:$0xff]
  %v227 = vld [vmem:[%s4] sm:$0x3]
  %v229 = vlaneseq
  %v230 = vshrl.u32 %v229, 7
  %v231 = vsub.s32 0, %v230
  %v232 = vrot.slane %v227, %v231
  %v233 = vlaneseq
  %v234 = vshrl.u32 %v233, 7
  %v235 = vsub.s32 1, %v234
  %v236 = vrot.slane %v227, %v235
  %v255 = vunpack.c.l.b16 %v211
  %v256 = vunpack.c.h.b16 %v211
  %v257 = vunpack.c.l.b16 %v212
  %v258 = vunpack.c.h.b16 %v212
  %v259 = vunpack.c.l.b16 %v213
  %v260 = vunpack.c.h.b16 %v213
  %v261 = vunpack.c.l.b16 %v214
  %v262 = vunpack.c.h.b16 %v214
  %v263 = vunpack.c.l.b16 %v215
  %v264 = vunpack.c.h.b16 %v215
  %v265 = vunpack.c.l.b16 %v216
  %v266 = vunpack.c.h.b16 %v216
  %v267 = vunpack.c.l.b16 %v217
  %v268 = vunpack.c.h.b16 %v217
  %v269 = vunpack.c.l.b16 %v218
  %v270 = vunpack.c.h.b16 %v218
  %v271 = vunpack.c.l.b16 %v219
  %v272 = vunpack.c.h.b16 %v219
  %v273 = vunpack.c.l.b16 %v220
  %v274 = vunpack.c.h.b16 %v220
  %v275 = vunpack.c.l.b16 %v221
  %v276 = vunpack.c.h.b16 %v221
  %v277 = vunpack.c.l.b16 %v222
  %v278 = vunpack.c.h.b16 %v222
  %v279 = vunpack.c.l.b16 %v223
  %v280 = vunpack.c.h.b16 %v223
  %v281 = vunpack.c.l.b16 %v224
  %v282 = vunpack.c.h.b16 %v224
  %v283 = vunpack.c.l.b16 %v225
  %v284 = vunpack.c.h.b16 %v225
  %v285 = vunpack.c.l.b16 %v226
  %v286 = vunpack.c.h.b16 %v226
  %v287 = vpack.c.b16 %v257, %v255
  %v288 = vpack.c.b16 %v258, %v256
  %v289 = vpack.c.b16 %v261, %v259
  %v290 = vpack.c.b16 %v262, %v260
  %v291 = vpack.c.b16 %v265, %v263
  %v292 = vpack.c.b16 %v266, %v264
  %v293 = vpack.c.b16 %v269, %v267
  %v294 = vpack.c.b16 %v270, %v268
  %v295 = vpack.c.b16 %v273, %v271
  %v296 = vpack.c.b16 %v274, %v272
  %v297 = vpack.c.b16 %v277, %v275
  %v298 = vpack.c.b16 %v278, %v276
  %v299 = vpack.c.b16 %v281, %v279
  %v300 = vpack.c.b16 %v282, %v280
  %v301 = vpack.c.b16 %v285, %v283
  %v302 = vpack.c.b16 %v286, %v284
  %319 = vmatprep.subr.bf16.mxu0 %v288
  %320 = vmatpush1.bf16.msra.mxu0 %v287
  %321 = vmatprep.subr.bf16.mxu0 %v290
  %322 = vmatpush1.bf16.msra.mxu0 %v289
  %323 = vmatprep.subr.bf16.mxu0 %v292
  %324 = vmatpush1.bf16.msra.mxu0 %v291
  %325 = vmatprep.subr.bf16.mxu0 %v294
  %326 = vmatpush1.bf16.msra.mxu0 %v293
  %327 = vmatprep.subr.bf16.mxu0 %v296
  %328 = vmatpush1.bf16.msra.mxu0 %v295
  %329 = vmatprep.subr.bf16.mxu0 %v298
  %330 = vmatpush1.bf16.msra.mxu0 %v297
  %331 = vmatprep.subr.bf16.mxu0 %v300
  %332 = vmatpush1.bf16.msra.mxu0 %v299
  %333 = vmatprep.subr.bf16.mxu0 %v302
  %334 = vmatpush1.bf16.msra.mxu0 %v301
  %335 = vmatprep.subr.bf16.mxu0 0
  %336 = vmatpush1.bf16.msra.mxu0 0
  %337 = vmatprep.subr.bf16.mxu0 0
  %338 = vmatpush1.bf16.msra.mxu0 0
  %339 = vmatprep.subr.bf16.mxu0 0
  %340 = vmatpush1.bf16.msra.mxu0 0
  %341 = vmatprep.subr.bf16.mxu0 0
  %342 = vmatpush1.bf16.msra.mxu0 0
  %343 = vmatprep.subr.bf16.mxu0 0
  %344 = vmatpush1.bf16.msra.mxu0 0
  %345 = vmatprep.subr.bf16.mxu0 0
  %346 = vmatpush1.bf16.msra.mxu0 0
  %347 = vmatprep.subr.bf16.mxu0 0
  %348 = vmatpush1.bf16.msra.mxu0 0
  %349 = vmatprep.subr.bf16.mxu0 0
  %350 = vmatpush1.bf16.msra.mxu0 0
  %351 = vmatprep.mubr.bf16.mxu0 0
  %352 = vmatmul.mubr.bf16.gmra.mrb[0].mxu0 %v210
  %v353 = vpop.f32.mrb[0].mxu0
  %v354 = vadd.f32 %v232, %v353
  %v355 = vpop.f32.mrb[0].mxu0
  %v356 = vadd.f32 %v236, %v355
  %v357 = vpop.f32.mrb[0].mxu0
  %v358 = vpop.f32.mrb[0].mxu0
  %359 = vdwg.mxu0
  %v360 = vmax.f32 %v354, 0.0
  %v361 = vmax.f32 %v356, 0.0
  %v362 = vpack.c.bf16 %v360, %v360
  %v363 = vpack.c.bf16 %v361, %v361
  %v364 = vld [vmem:[%s5] sm:$0xf]
  %v365 = vld [vmem:[%s5 + $0x4] sm:$0xf]
  %v366 = vld [vmem:[%s5 + $0x8] sm:$0xf]
  %v367 = vld [vmem:[%s5 + $0xc] sm:$0xf]
  %v368 = vld [vmem:[%s5 + $0x10] sm:$0xf]
  %v369 = vld [vmem:[%s5 + $0x14] sm:$0xf]
  %v370 = vld [vmem:[%s5 + $0x18] sm:$0xf]
  %v371 = vld [vmem:[%s5 + $0x1c] sm:$0xf]
  %v372 = vld [vmem:[%s5 + $0x20] sm:$0xf]
  %v373 = vld [vmem:[%s5 + $0x24] sm:$0xf]
  %v374 = vld [vmem:[%s5 + $0x28] sm:$0xf]
  %v375 = vld [vmem:[%s5 + $0x2c] sm:$0xf]
  %v376 = vld [vmem:[%s5 + $0x30] sm:$0xf]
  %v377 = vld [vmem:[%s5 + $0x34] sm:$0xf]
  %v378 = vld [vmem:[%s5 + $0x38] sm:$0xf]
  %v379 = vld [vmem:[%s5 + $0x3c] sm:$0xf]
  %v380 = vld [vmem:[%s5 + $0x40] sm:$0xf]
  %v381 = vld [vmem:[%s5 + $0x44] sm:$0xf]
  %v382 = vld [vmem:[%s5 + $0x48] sm:$0xf]
  %v383 = vld [vmem:[%s5 + $0x4c] sm:$0xf]
  %v384 = vld [vmem:[%s5 + $0x50] sm:$0xf]
  %v385 = vld [vmem:[%s5 + $0x54] sm:$0xf]
  %v386 = vld [vmem:[%s5 + $0x58] sm:$0xf]
  %v387 = vld [vmem:[%s5 + $0x5c] sm:$0xf]
  %v388 = vld [vmem:[%s5 + $0x60] sm:$0xf]
  %v389 = vld [vmem:[%s5 + $0x64] sm:$0xf]
  %v390 = vld [vmem:[%s5 + $0x68] sm:$0xf]
  %v391 = vld [vmem:[%s5 + $0x6c] sm:$0xf]
  %v392 = vld [vmem:[%s5 + $0x70] sm:$0xf]
  %v393 = vld [vmem:[%s5 + $0x74] sm:$0xf]
  %v394 = vld [vmem:[%s5 + $0x78] sm:$0xf]
  %v395 = vld [vmem:[%s5 + $0x7c] sm:$0xf]
  %v428 = vunpack.c.l.b16 %v364
  %v429 = vunpack.c.l.b16 %v365
  %v430 = vunpack.c.l.b16 %v366
  %v431 = vunpack.c.l.b16 %v367
  %v432 = vunpack.c.l.b16 %v368
  %v433 = vunpack.c.l.b16 %v369
  %v434 = vunpack.c.l.b16 %v370
  %v435 = vunpack.c.l.b16 %v371
  %v436 = vunpack.c.l.b16 %v372
  %v437 = vunpack.c.l.b16 %v373
  %v438 = vunpack.c.l.b16 %v374
  %v439 = vunpack.c.l.b16 %v375
  %v440 = vunpack.c.l.b16 %v376
  %v441 = vunpack.c.l.b16 %v377
  %v442 = vunpack.c.l.b16 %v378
  %v443 = vunpack.c.l.b16 %v379
  %v444 = vunpack.c.l.b16 %v380
  %v445 = vunpack.c.l.b16 %v381
  %v446 = vunpack.c.l.b16 %v382
  %v447 = vunpack.c.l.b16 %v383
  %v448 = vunpack.c.l.b16 %v384
  %v449 = vunpack.c.l.b16 %v385
  %v450 = vunpack.c.l.b16 %v386
  %v451 = vunpack.c.l.b16 %v387
  %v452 = vunpack.c.l.b16 %v388
  %v453 = vunpack.c.l.b16 %v389
  %v454 = vunpack.c.l.b16 %v390
  %v455 = vunpack.c.l.b16 %v391
  %v456 = vunpack.c.l.b16 %v392
  %v457 = vunpack.c.l.b16 %v393
  %v458 = vunpack.c.l.b16 %v394
  %v459 = vunpack.c.l.b16 %v395
  %v460 = vpack.c.b16 %v429, %v428
  %v461 = vpack.c.b16 %v431, %v430
  %v462 = vpack.c.b16 %v433, %v432
  %v463 = vpack.c.b16 %v435, %v434
  %v464 = vpack.c.b16 %v437, %v436
  %v465 = vpack.c.b16 %v439, %v438
  %v466 = vpack.c.b16 %v441, %v440
  %v467 = vpack.c.b16 %v443, %v442
  %v468 = vpack.c.b16 %v445, %v444
  %v469 = vpack.c.b16 %v447, %v446
  %v470 = vpack.c.b16 %v449, %v448
  %v471 = vpack.c.b16 %v451, %v450
  %v472 = vpack.c.b16 %v453, %v452
  %v473 = vpack.c.b16 %v455, %v454
  %v474 = vpack.c.b16 %v457, %v456
  %v475 = vpack.c.b16 %v459, %v458
  %492 = vmatprep.subr.bf16.mxu0 0
  %493 = vmatpush1.bf16.msra.mxu0 %v460
  %494 = vmatprep.subr.bf16.mxu0 0
  %495 = vmatpush1.bf16.msra.mxu0 %v461
  %496 = vmatprep.subr.bf16.mxu0 0
  %497 = vmatpush1.bf16.msra.mxu0 %v462
  %498 = vmatprep.subr.bf16.mxu0 0
  %499 = vmatpush1.bf16.msra.mxu0 %v463
  %500 = vmatprep.subr.bf16.mxu0 0
  %501 = vmatpush1.bf16.msra.mxu0 %v464
  %502 = vmatprep.subr.bf16.mxu0 0
  %503 = vmatpush1.bf16.msra.mxu0 %v465
  %504 = vmatprep.subr.bf16.mxu0 0
  %505 = vmatpush1.bf16.msra.mxu0 %v466
  %506 = vmatprep.subr.bf16.mxu0 0
  %507 = vmatpush1.bf16.msra.mxu0 %v467
  %508 = vmatprep.subr.bf16.mxu0 0
  %509 = vmatpush1.bf16.msra.mxu0 %v468
  %510 = vmatprep.subr.bf16.mxu0 0
  %511 = vmatpush1.bf16.msra.mxu0 %v469
  %512 = vmatprep.subr.bf16.mxu0 0
  %513 = vmatpush1.bf16.msra.mxu0 %v470
  %514 = vmatprep.subr.bf16.mxu0 0
  %515 = vmatpush1.bf16.msra.mxu0 %v471
  %516 = vmatprep.subr.bf16.mxu0 0
  %517 = vmatpush1.bf16.msra.mxu0 %v472
  %518 = vmatprep.subr.bf16.mxu0 0
  %519 = vmatpush1.bf16.msra.mxu0 %v473
  %520 = vmatprep.subr.bf16.mxu0 0
  %521 = vmatpush1.bf16.msra.mxu0 %v474
  %522 = vmatprep.subr.bf16.mxu0 0
  %523 = vmatpush1.bf16.msra.mxu0 %v475
  %524 = vmatprep.mubr.bf16.mxu0 %v363
  %525 = vmatmul.mubr.bf16.gmra.mrb[0].mxu0 %v362
  %v526 = vpop.f32.mrb[0].mxu0
  %v527 = vadd.f32 0.0, %v526
  %v528 = vpop.f32.mrb[0].mxu0
  %v529 = vpop.f32.mrb[0].mxu0
  %v530 = vpop.f32.mrb[0].mxu0
  %531 = vdwg.mxu0
  %v532 = vadd.f32 %v205, %v527
  %v533 = vld [vmem:[%s6] sm:$0x1]
  %v535 = vlaneseq
  %v536 = vshrl.u32 %v535, 7
  %v537 = vsub.s32 0, %v536
  %v538 = vrot.slane %v533, %v537
  %v540 = vadd.f32 %v532, %v538
  %v541 = vpack.c.bf16 %v540, %v540
  %542 = vst [vmem:[%s7] sm:$0xf] %v541
  // Predicated region
  $region30: #{timm_model_forward.7} parent=0 // pred_check
    _
  $region31: #{timm_model_forward.7} parent=0 // pred_check_branch
    %544 = sbr.rel (0) target = $region33
  $region32: #{timm_model_forward.7} parent=0 // pred_region
    _
  $region33: #{timm_model_forward.7} parent=0 // pred_fallthru
    _
  // Predicated region
  $region34: #{timm_model_forward.7} parent=0 // pred_check
    _
  $region35: #{timm_model_forward.7} parent=0 // pred_check_branch
    %546 = sbr.rel (0) target = $region37
  $region36: #{timm_model_forward.7} parent=0 // pred_region
    _
  $region37: #{timm_model_forward.7} parent=0 // pred_fallthru
    _

</llo_original>
